<compile_context>
chip_gen: v7x
topology: tpu7x:2x2x1
jax: 0.10.0
libtpu: 0.0.40
codegen_flags: <defaults>
</compile_context>

<pallas_src>
import jax
import jax.numpy as jnp
from jax.experimental import pallas as pl
from jax.experimental.pallas import tpu as pltpu

_EPS = 1e-5


def _row_conv_weight(w_hwio, width):
    """Fold a (3, 3, Cin, Cout) HWIO conv weight into a per-kernel-row block-Toeplitz
    matrix of shape (3, (width+2)*Cin, width*Cout).

    Lane layout of the padded-width axis is "interior-first, halo-last":
      storage column s = x-1 for padded x in [1, width], s = width for x = 0 (left
      halo), s = width+1 for x = width+1 (right halo). The kernel writes the real
      input at lane offset 0 and leaves the halo lanes zero, so the Toeplitz matmul
      reproduces zero padding exactly.
    """
    kh, kw, cin, cout = w_hwio.shape
    wp = width + 2

    def col(x):  # padded x coordinate -> storage column
        if 1 <= x <= width:
            return x - 1
        return width if x == 0 else width + 1

    big = jnp.zeros((kh, wp, cin, width, cout), jnp.float32)
    for w in range(width):
        for dw in range(kw):
            big = big.at[:, col(w + dw), :, w, :].set(w_hwio[:, dw, :, :])
    return big.reshape(kh, wp * cin, width * cout)


def _make_double_conv_kernel(N, H, W, Cin, Cout):
    Wp = W + 2
    inv_m = 1.0 / float(N * H * W)  # BN reduces over N*H*W positions per channel

    def conv_bn_relu(xp_ref, w_ref, gamma, beta, gmat, gtmat, C):
        """xp_ref: (N, H+2, (W+2)*C) padded slab in VMEM; w_ref: (3, (W+2)*C, W*Cout).
        Returns the lane-dense activation (N*H, W*Cout)."""
        xp = xp_ref[...]
        # Conv as 3 MXU matmuls (one per kernel row); all width taps folded into K.
        acc = jnp.zeros((N * H, W * Cout), jnp.float32)
        for r in range(3):
            patches = xp[:, r:r + H, :].reshape(N * H, Wp * C)
            acc = acc + jnp.dot(patches, w_ref[r],
                                preferred_element_type=jnp.float32)

        # Fused BatchNorm (training-mode): one pass of sum / sum-of-squares,
        # folded into a single per-channel scale/bias, then fused ReLU.
        lane_s = jnp.sum(acc, axis=0, keepdims=True)          # (1, W*Cout)
        lane_q = jnp.sum(acc * acc, axis=0, keepdims=True)    # (1, W*Cout)
        ch_s = jnp.dot(lane_s, gmat, preferred_element_type=jnp.float32)  # (1, Cout)
        ch_q = jnp.dot(lane_q, gmat, preferred_element_type=jnp.float32)  # (1, Cout)
        mean = ch_s * inv_m
        var = ch_q * inv_m - mean * mean                      # biased variance
        scale = gamma * jax.lax.rsqrt(var + _EPS)              # (1, Cout)
        bias = beta - mean * scale                             # (1, Cout)
        # Broadcast per-channel scale/bias back to the lane-dense (W*Cout) layout.
        scale_l = jnp.dot(scale, gtmat, preferred_element_type=jnp.float32)
        bias_l = jnp.dot(bias, gtmat, preferred_element_type=jnp.float32)
        return jnp.maximum(acc * scale_l + bias_l, 0.0)        # (N*H, W*Cout)

    def kernel(x_ref, w1_ref, w2_ref, g1_ref, b1_ref, g2_ref, b2_ref,
               gmat_ref, gtmat_ref, o_ref, xp1_ref, xp2_ref):
        gmat = gmat_ref[...]
        gtmat = gtmat_ref[...]

        # ---- stage 1: pad (in VMEM) -> conv 3x3 -> BN -> ReLU ----
        xp1_ref[...] = jnp.zeros_like(xp1_ref)                 # halo rows/lanes = 0
        xp1_ref[:, 1:H + 1, 0:W * Cin] = x_ref[...]            # interior at offset 0
        y1 = conv_bn_relu(xp1_ref, w1_ref, g1_ref[...], b1_ref[...],
                          gmat, gtmat, Cin)                    # (N*H, W*Cout)

        # ---- stage 2: intermediate never leaves VMEM ----
        xp2_ref[...] = jnp.zeros_like(xp2_ref)
        xp2_ref[:, 1:H + 1, 0:W * Cout] = y1.reshape(N, H, W * Cout)
        y2 = conv_bn_relu(xp2_ref, w2_ref, g2_ref[...], b2_ref[...],
                          gmat, gtmat, Cout)

        o_ref[...] = y2                                        # lane-dense store

    return kernel


def double_conv_forward(x_nchw, w1, g1, b1, w2, g2, b2):
    """Equivalent of DoubleConv(in_channels, out_channels).forward(x).

    x_nchw : (N, Cin, H, W)   w1: (3,3,Cin,Cout) HWIO   w2: (3,3,Cout,Cout) HWIO
    g*/b*  : (Cout,) BatchNorm affine parameters.
    """
    N, Cin, H, W = x_nchw.shape
    Cout = w1.shape[-1]
    Wp = W + 2

    # Layout plumbing outside the kernel (cheap XLA reshapes/transposes).
    x2d = jnp.transpose(x_nchw, (0, 2, 3, 1)).reshape(N, H, W * Cin)
    x2d = x2d.astype(jnp.float32)
    wbig1 = _row_conv_weight(w1.astype(jnp.float32), W)   # (3, Wp*Cin,  W*Cout)
    wbig2 = _row_conv_weight(w2.astype(jnp.float32), W)   # (3, Wp*Cout, W*Cout)
    # Fold / broadcast matrices between the lane-dense (W*Cout) layout and channels.
    gmat = jnp.tile(jnp.eye(Cout, dtype=jnp.float32), (W, 1))   # (W*Cout, Cout)
    gtmat = gmat.T                                              # (Cout, W*Cout)

    kernel = _make_double_conv_kernel(N, H, W, Cin, Cout)
    vmem = pl.BlockSpec(memory_space=pltpu.MemorySpace.VMEM)

    out2d = pl.pallas_call(
        kernel,
        out_shape=jax.ShapeDtypeStruct((N * H, W * Cout), jnp.float32),
        in_specs=[vmem] * 9,
        out_specs=vmem,
        scratch_shapes=[
            pltpu.VMEM((N, H + 2, Wp * Cin), jnp.float32),    # padded stage-1 input
            pltpu.VMEM((N, H + 2, Wp * Cout), jnp.float32),   # padded stage-1 output
        ],
        compiler_params=pltpu.CompilerParams(
            # Explicit cap: tiny workload, well under scoped defaults on v5e/v6e/v7x.
            vmem_limit_bytes=32 * 1024 * 1024,
        ),
    )(x2d, wbig1, wbig2,
      g1.reshape(1, Cout).astype(jnp.float32), b1.reshape(1, Cout).astype(jnp.float32),
      g2.reshape(1, Cout).astype(jnp.float32), b2.reshape(1, Cout).astype(jnp.float32),
      gmat, gtmat)

    # (N*H, W*Cout) -> NHWC -> NCHW
    return jnp.transpose(out2d.reshape(N, H, W, Cout), (0, 3, 1, 2))


# ---------------------------------------------------------------------------
# Pure-JAX reference (correctness sanity check only).
# ---------------------------------------------------------------------------
def _ref_conv_bn_relu(x_nhwc, w_hwio, gamma, beta):
    y = jax.lax.conv_general_dilated(
        x_nhwc, w_hwio, window_strides=(1, 1), padding="SAME",
        dimension_numbers=("NHWC", "HWIO", "NHWC"))
    mean = jnp.mean(y, axis=(0, 1, 2), keepdims=True)
    var = jnp.mean(jnp.square(y - mean), axis=(0, 1, 2), keepdims=True)
    y = (y - mean) * jax.lax.rsqrt(var + _EPS) * gamma + beta
    return jnp.maximum(y, 0.0)


def _ref_double_conv(x_nchw, w1, g1, b1, w2, g2, b2):
    x = jnp.transpose(x_nchw, (0, 2, 3, 1))
    y = _ref_conv_bn_relu(x, w1, g1, b1)
    y = _ref_conv_bn_relu(y, w2, g2, b2)
    return jnp.transpose(y, (0, 3, 1, 2))


if __name__ == "__main__":
    N, C_IN, C_OUT, H, W = 2, 4, 8, 16, 16

    key = jax.random.PRNGKey(0)
    kx, kw1, kw2 = jax.random.split(key, 3)

    # Input (NCHW, like PyTorch).
    x = jax.random.normal(kx, (N, C_IN, H, W), dtype=jnp.float32)

    # Conv weights, HWIO, uniform(-1/sqrt(fan_in), 1/sqrt(fan_in)) like PyTorch default.
    fan1 = C_IN * 3 * 3
    w1 = jax.random.uniform(kw1, (3, 3, C_IN, C_OUT), dtype=jnp.float32,
                            minval=-1.0 / jnp.sqrt(fan1), maxval=1.0 / jnp.sqrt(fan1))
    fan2 = C_OUT * 3 * 3
    w2 = jax.random.uniform(kw2, (3, 3, C_OUT, C_OUT), dtype=jnp.float32,
                            minval=-1.0 / jnp.sqrt(fan2), maxval=1.0 / jnp.sqrt(fan2))

    # BatchNorm affine params (PyTorch defaults: gamma=1, beta=0).
    g1 = jnp.ones((C_OUT,), jnp.float32)
    b1 = jnp.zeros((C_OUT,), jnp.float32)
    g2 = jnp.ones((C_OUT,), jnp.float32)
    b2 = jnp.zeros((C_OUT,), jnp.float32)

    out = jax.block_until_ready(double_conv_forward(x, w1, g1, b1, w2, g2, b2))
    ref = jax.block_until_ready(_ref_double_conv(x, w1, g1, b1, w2, g2, b2))

    assert out.shape == (N, C_OUT, H, W)
    assert jnp.allclose(out, ref, rtol=1e-2, atol=1e-2)

    print("KERNEL_OK")
</pallas_src>

<mosaic_0001>
module attributes {stable_mosaic.version = 11 : i64} {
  func.func @kernel(%arg0: memref<2x16x64xf32, #tpu.memory_space<vmem>>, %arg1: memref<3x72x128xf32, #tpu.memory_space<vmem>>, %arg2: memref<3x144x128xf32, #tpu.memory_space<vmem>>, %arg3: memref<1x8xf32, #tpu.memory_space<vmem>>, %arg4: memref<1x8xf32, #tpu.memory_space<vmem>>, %arg5: memref<1x8xf32, #tpu.memory_space<vmem>>, %arg6: memref<1x8xf32, #tpu.memory_space<vmem>>, %arg7: memref<128x8xf32, #tpu.memory_space<vmem>>, %arg8: memref<8x128xf32, #tpu.memory_space<vmem>>, %arg9: memref<32x128xf32, #tpu.memory_space<vmem>>, %arg10: memref<2x18x72xf32, #tpu.memory_space<vmem>>, %arg11: memref<2x18x144xf32, #tpu.memory_space<vmem>>) attributes {dimension_semantics = [], scalar_prefetch = 0 : i64, scratch_operands = 2 : i64, tpu.core_type = #tpu.core_type<tc>} {
    %c0 = arith.constant 0 : index
    %c0_0 = arith.constant 0 : index
    %0 = vector.load %arg7[%c0, %c0_0] : memref<128x8xf32, #tpu.memory_space<vmem>>, vector<128x8xf32>
    %c0_1 = arith.constant 0 : index
    %c0_2 = arith.constant 0 : index
    %1 = vector.load %arg8[%c0_1, %c0_2] : memref<8x128xf32, #tpu.memory_space<vmem>>, vector<8x128xf32>
    %cst = arith.constant 0.000000e+00 : f32
    %2 = vector.broadcast %cst : f32 to vector<2x18x72xf32>
    %c0_3 = arith.constant 0 : index
    %c0_4 = arith.constant 0 : index
    %c0_5 = arith.constant 0 : index
    %3 = vector.load %arg10[%c0_3, %c0_4, %c0_5] : memref<2x18x72xf32, #tpu.memory_space<vmem>>, vector<2x18x72xf32>
    tpu.vector_store %arg10[%c0_3, %c0_4, %c0_5], %2 {strides = array<i32>} : memref<2x18x72xf32, #tpu.memory_space<vmem>>, vector<2x18x72xf32>,
    %c0_6 = arith.constant 0 : index
    %c0_7 = arith.constant 0 : index
    %c0_8 = arith.constant 0 : index
    %4 = vector.load %arg0[%c0_6, %c0_7, %c0_8] : memref<2x16x64xf32, #tpu.memory_space<vmem>>, vector<2x16x64xf32>
    %c0_9 = arith.constant 0 : index
    %c1 = arith.constant 1 : index
    %c0_10 = arith.constant 0 : index
    %5 = vector.load %arg10[%c0_9, %c1, %c0_10] : memref<2x18x72xf32, #tpu.memory_space<vmem>>, vector<2x16x64xf32>
    tpu.vector_store %arg10[%c0_9, %c1, %c0_10], %4 {strides = array<i32>} : memref<2x18x72xf32, #tpu.memory_space<vmem>>, vector<2x16x64xf32>,
    %c0_11 = arith.constant 0 : index
    %c0_12 = arith.constant 0 : index
    %6 = vector.load %arg3[%c0_11, %c0_12] : memref<1x8xf32, #tpu.memory_space<vmem>>, vector<1x8xf32>
    %c0_13 = arith.constant 0 : index
    %c0_14 = arith.constant 0 : index
    %7 = vector.load %arg4[%c0_13, %c0_14] : memref<1x8xf32, #tpu.memory_space<vmem>>, vector<1x8xf32>
    %c0_15 = arith.constant 0 : index
    %c0_16 = arith.constant 0 : index
    %c0_17 = arith.constant 0 : index
    %8 = vector.load %arg10[%c0_15, %c0_16, %c0_17] : memref<2x18x72xf32, #tpu.memory_space<vmem>>, vector<2x18x72xf32>
    %cst_18 = arith.constant 0.000000e+00 : f32
    %9 = vector.broadcast %cst_18 : f32 to vector<32x128xf32>
    %10 = vector.extract_strided_slice %8 {offsets = [0, 0, 0], sizes = [2, 16, 72], strides = [1, 1, 1]} : vector<2x18x72xf32> to vector<2x16x72xf32>
    %11 = vector.shape_cast %10 : vector<2x16x72xf32> to vector<32x72xf32>
    %c0_19 = arith.constant 0 : index
    %c0_20 = arith.constant 0 : index
    %c0_21 = arith.constant 0 : index
    %12 = vector.load %arg1[%c0_19, %c0_20, %c0_21] : memref<3x72x128xf32, #tpu.memory_space<vmem>>, vector<1x72x128xf32>
    %13 = vector.shape_cast %12 : vector<1x72x128xf32> to vector<72x128xf32>
    %cst_22 = arith.constant dense<0.000000e+00> : vector<32x128xf32>
    %14 = tpu.matmul %11, %13, %cst_22 {dimension_numbers = #tpu.dot_dimension_numbers<[1], [0], [0], [1], [0, 0, 1, 1], [], []>} : vector<32x72xf32>, vector<72x128xf32>, vector<32x128xf32> -> vector<32x128xf32>
    %15 = arith.addf %9, %14 : vector<32x128xf32>
    %16 = vector.extract_strided_slice %8 {offsets = [0, 1, 0], sizes = [2, 16, 72], strides = [1, 1, 1]} : vector<2x18x72xf32> to vector<2x16x72xf32>
    %17 = vector.shape_cast %16 : vector<2x16x72xf32> to vector<32x72xf32>
    %c1_23 = arith.constant 1 : index
    %c0_24 = arith.constant 0 : index
    %c0_25 = arith.constant 0 : index
    %18 = vector.load %arg1[%c1_23, %c0_24, %c0_25] : memref<3x72x128xf32, #tpu.memory_space<vmem>>, vector<1x72x128xf32>
    %19 = vector.shape_cast %18 : vector<1x72x128xf32> to vector<72x128xf32>
    %cst_26 = arith.constant dense<0.000000e+00> : vector<32x128xf32>
    %20 = tpu.matmul %17, %19, %cst_26 {dimension_numbers = #tpu.dot_dimension_numbers<[1], [0], [0], [1], [0, 0, 1, 1], [], []>} : vector<32x72xf32>, vector<72x128xf32>, vector<32x128xf32> -> vector<32x128xf32>
    %21 = arith.addf %15, %20 : vector<32x128xf32>
    %22 = vector.extract_strided_slice %8 {offsets = [0, 2, 0], sizes = [2, 16, 72], strides = [1, 1, 1]} : vector<2x18x72xf32> to vector<2x16x72xf32>
    %23 = vector.shape_cast %22 : vector<2x16x72xf32> to vector<32x72xf32>
    %c2 = arith.constant 2 : index
    %c0_27 = arith.constant 0 : index
    %c0_28 = arith.constant 0 : index
    %24 = vector.load %arg1[%c2, %c0_27, %c0_28] : memref<3x72x128xf32, #tpu.memory_space<vmem>>, vector<1x72x128xf32>
    %25 = vector.shape_cast %24 : vector<1x72x128xf32> to vector<72x128xf32>
    %cst_29 = arith.constant dense<0.000000e+00> : vector<32x128xf32>
    %26 = tpu.matmul %23, %25, %cst_29 {dimension_numbers = #tpu.dot_dimension_numbers<[1], [0], [0], [1], [0, 0, 1, 1], [], []>} : vector<32x72xf32>, vector<72x128xf32>, vector<32x128xf32> -> vector<32x128xf32>
    %27 = arith.addf %21, %26 : vector<32x128xf32>
    %cst_30 = arith.constant dense<0.000000e+00> : vector<128xf32>
    %28 = vector.multi_reduction <add>, %27, %cst_30 [0] : vector<32x128xf32> to vector<128xf32>
    %29 = vector.shape_cast %28 : vector<128xf32> to vector<1x128xf32>
    %30 = arith.mulf %27, %27 : vector<32x128xf32>
    %cst_31 = arith.constant dense<0.000000e+00> : vector<128xf32>
    %31 = vector.multi_reduction <add>, %30, %cst_31 [0] : vector<32x128xf32> to vector<128xf32>
    %32 = vector.shape_cast %31 : vector<128xf32> to vector<1x128xf32>
    %cst_32 = arith.constant dense<0.000000e+00> : vector<1x8xf32>
    %33 = tpu.matmul %29, %0, %cst_32 {dimension_numbers = #tpu.dot_dimension_numbers<[1], [0], [0], [1], [0, 0, 1, 1], [], []>} : vector<1x128xf32>, vector<128x8xf32>, vector<1x8xf32> -> vector<1x8xf32>
    %cst_33 = arith.constant dense<0.000000e+00> : vector<1x8xf32>
    %34 = tpu.matmul %32, %0, %cst_33 {dimension_numbers = #tpu.dot_dimension_numbers<[1], [0], [0], [1], [0, 0, 1, 1], [], []>} : vector<1x128xf32>, vector<128x8xf32>, vector<1x8xf32> -> vector<1x8xf32>
    %cst_34 = arith.constant 0.001953125 : f32
    %35 = vector.broadcast %cst_34 : f32 to vector<1x8xf32>
    %36 = arith.mulf %33, %35 : vector<1x8xf32>
    %cst_35 = arith.constant 0.001953125 : f32
    %37 = vector.broadcast %cst_35 : f32 to vector<1x8xf32>
    %38 = arith.mulf %34, %37 : vector<1x8xf32>
    %39 = arith.mulf %36, %36 : vector<1x8xf32>
    %40 = arith.subf %38, %39 : vector<1x8xf32>
    %cst_36 = arith.constant 9.99999974E-6 : f32
    %41 = vector.broadcast %cst_36 : f32 to vector<1x8xf32>
    %42 = arith.addf %40, %41 : vector<1x8xf32>
    %43 = math.rsqrt %42 : vector<1x8xf32>
    %44 = arith.mulf %6, %43 : vector<1x8xf32>
    %45 = arith.mulf %36, %44 : vector<1x8xf32>
    %46 = arith.subf %7, %45 : vector<1x8xf32>
    %cst_37 = arith.constant dense<0.000000e+00> : vector<1x128xf32>
    %47 = tpu.matmul %44, %1, %cst_37 {dimension_numbers = #tpu.dot_dimension_numbers<[1], [0], [0], [1], [0, 0, 1, 1], [], []>} : vector<1x8xf32>, vector<8x128xf32>, vector<1x128xf32> -> vector<1x128xf32>
    %cst_38 = arith.constant dense<0.000000e+00> : vector<1x128xf32>
    %48 = tpu.matmul %46, %1, %cst_38 {dimension_numbers = #tpu.dot_dimension_numbers<[1], [0], [0], [1], [0, 0, 1, 1], [], []>} : vector<1x8xf32>, vector<8x128xf32>, vector<1x128xf32> -> vector<1x128xf32>
    %49 = vector.broadcast %47 : vector<1x128xf32> to vector<32x128xf32>
    %50 = arith.mulf %27, %49 : vector<32x128xf32>
    %51 = vector.broadcast %48 : vector<1x128xf32> to vector<32x128xf32>
    %52 = arith.addf %50, %51 : vector<32x128xf32>
    %cst_39 = arith.constant 0.000000e+00 : f32
    %53 = vector.broadcast %cst_39 : f32 to vector<32x128xf32>
    %54 = arith.maximumf %52, %53 : vector<32x128xf32>
    %cst_40 = arith.constant 0.000000e+00 : f32
    %55 = vector.broadcast %cst_40 : f32 to vector<2x18x144xf32>
    %c0_41 = arith.constant 0 : index
    %c0_42 = arith.constant 0 : index
    %c0_43 = arith.constant 0 : index
    %56 = vector.load %arg11[%c0_41, %c0_42, %c0_43] : memref<2x18x144xf32, #tpu.memory_space<vmem>>, vector<2x18x144xf32>
    tpu.vector_store %arg11[%c0_41, %c0_42, %c0_43], %55 {strides = array<i32>} : memref<2x18x144xf32, #tpu.memory_space<vmem>>, vector<2x18x144xf32>,
    %57 = vector.shape_cast %54 : vector<32x128xf32> to vector<2x16x128xf32>
    %c0_44 = arith.constant 0 : index
    %c1_45 = arith.constant 1 : index
    %c0_46 = arith.constant 0 : index
    %58 = vector.load %arg11[%c0_44, %c1_45, %c0_46] : memref<2x18x144xf32, #tpu.memory_space<vmem>>, vector<2x16x128xf32>
    tpu.vector_store %arg11[%c0_44, %c1_45, %c0_46], %57 {strides = array<i32>} : memref<2x18x144xf32, #tpu.memory_space<vmem>>, vector<2x16x128xf32>,
    %c0_47 = arith.constant 0 : index
    %c0_48 = arith.constant 0 : index
    %59 = vector.load %arg5[%c0_47, %c0_48] : memref<1x8xf32, #tpu.memory_space<vmem>>, vector<1x8xf32>
    %c0_49 = arith.constant 0 : index
    %c0_50 = arith.constant 0 : index
    %60 = vector.load %arg6[%c0_49, %c0_50] : memref<1x8xf32, #tpu.memory_space<vmem>>, vector<1x8xf32>
    %c0_51 = arith.constant 0 : index
    %c0_52 = arith.constant 0 : index
    %c0_53 = arith.constant 0 : index
    %61 = vector.load %arg11[%c0_51, %c0_52, %c0_53] : memref<2x18x144xf32, #tpu.memory_space<vmem>>, vector<2x18x144xf32>
    %cst_54 = arith.constant 0.000000e+00 : f32
    %62 = vector.broadcast %cst_54 : f32 to vector<32x128xf32>
    %63 = vector.extract_strided_slice %61 {offsets = [0, 0, 0], sizes = [2, 16, 144], strides = [1, 1, 1]} : vector<2x18x144xf32> to vector<2x16x144xf32>
    %64 = vector.shape_cast %63 : vector<2x16x144xf32> to vector<32x144xf32>
    %c0_55 = arith.constant 0 : index
    %c0_56 = arith.constant 0 : index
    %c0_57 = arith.constant 0 : index
    %65 = vector.load %arg2[%c0_55, %c0_56, %c0_57] : memref<3x144x128xf32, #tpu.memory_space<vmem>>, vector<1x144x128xf32>
    %66 = vector.shape_cast %65 : vector<1x144x128xf32> to vector<144x128xf32>
    %cst_58 = arith.constant dense<0.000000e+00> : vector<32x128xf32>
    %67 = tpu.matmul %64, %66, %cst_58 {dimension_numbers = #tpu.dot_dimension_numbers<[1], [0], [0], [1], [0, 0, 1, 1], [], []>} : vector<32x144xf32>, vector<144x128xf32>, vector<32x128xf32> -> vector<32x128xf32>
    %68 = arith.addf %62, %67 : vector<32x128xf32>
    %69 = vector.extract_strided_slice %61 {offsets = [0, 1, 0], sizes = [2, 16, 144], strides = [1, 1, 1]} : vector<2x18x144xf32> to vector<2x16x144xf32>
    %70 = vector.shape_cast %69 : vector<2x16x144xf32> to vector<32x144xf32>
    %c1_59 = arith.constant 1 : index
    %c0_60 = arith.constant 0 : index
    %c0_61 = arith.constant 0 : index
    %71 = vector.load %arg2[%c1_59, %c0_60, %c0_61] : memref<3x144x128xf32, #tpu.memory_space<vmem>>, vector<1x144x128xf32>
    %72 = vector.shape_cast %71 : vector<1x144x128xf32> to vector<144x128xf32>
    %cst_62 = arith.constant dense<0.000000e+00> : vector<32x128xf32>
    %73 = tpu.matmul %70, %72, %cst_62 {dimension_numbers = #tpu.dot_dimension_numbers<[1], [0], [0], [1], [0, 0, 1, 1], [], []>} : vector<32x144xf32>, vector<144x128xf32>, vector<32x128xf32> -> vector<32x128xf32>
    %74 = arith.addf %68, %73 : vector<32x128xf32>
    %75 = vector.extract_strided_slice %61 {offsets = [0, 2, 0], sizes = [2, 16, 144], strides = [1, 1, 1]} : vector<2x18x144xf32> to vector<2x16x144xf32>
    %76 = vector.shape_cast %75 : vector<2x16x144xf32> to vector<32x144xf32>
    %c2_63 = arith.constant 2 : index
    %c0_64 = arith.constant 0 : index
    %c0_65 = arith.constant 0 : index
    %77 = vector.load %arg2[%c2_63, %c0_64, %c0_65] : memref<3x144x128xf32, #tpu.memory_space<vmem>>, vector<1x144x128xf32>
    %78 = vector.shape_cast %77 : vector<1x144x128xf32> to vector<144x128xf32>
    %cst_66 = arith.constant dense<0.000000e+00> : vector<32x128xf32>
    %79 = tpu.matmul %76, %78, %cst_66 {dimension_numbers = #tpu.dot_dimension_numbers<[1], [0], [0], [1], [0, 0, 1, 1], [], []>} : vector<32x144xf32>, vector<144x128xf32>, vector<32x128xf32> -> vector<32x128xf32>
    %80 = arith.addf %74, %79 : vector<32x128xf32>
    %cst_67 = arith.constant dense<0.000000e+00> : vector<128xf32>
    %81 = vector.multi_reduction <add>, %80, %cst_67 [0] : vector<32x128xf32> to vector<128xf32>
    %82 = vector.shape_cast %81 : vector<128xf32> to vector<1x128xf32>
    %83 = arith.mulf %80, %80 : vector<32x128xf32>
    %cst_68 = arith.constant dense<0.000000e+00> : vector<128xf32>
    %84 = vector.multi_reduction <add>, %83, %cst_68 [0] : vector<32x128xf32> to vector<128xf32>
    %85 = vector.shape_cast %84 : vector<128xf32> to vector<1x128xf32>
    %cst_69 = arith.constant dense<0.000000e+00> : vector<1x8xf32>
    %86 = tpu.matmul %82, %0, %cst_69 {dimension_numbers = #tpu.dot_dimension_numbers<[1], [0], [0], [1], [0, 0, 1, 1], [], []>} : vector<1x128xf32>, vector<128x8xf32>, vector<1x8xf32> -> vector<1x8xf32>
    %cst_70 = arith.constant dense<0.000000e+00> : vector<1x8xf32>
    %87 = tpu.matmul %85, %0, %cst_70 {dimension_numbers = #tpu.dot_dimension_numbers<[1], [0], [0], [1], [0, 0, 1, 1], [], []>} : vector<1x128xf32>, vector<128x8xf32>, vector<1x8xf32> -> vector<1x8xf32>
    %cst_71 = arith.constant 0.001953125 : f32
    %88 = vector.broadcast %cst_71 : f32 to vector<1x8xf32>
    %89 = arith.mulf %86, %88 : vector<1x8xf32>
    %cst_72 = arith.constant 0.001953125 : f32
    %90 = vector.broadcast %cst_72 : f32 to vector<1x8xf32>
    %91 = arith.mulf %87, %90 : vector<1x8xf32>
    %92 = arith.mulf %89, %89 : vector<1x8xf32>
    %93 = arith.subf %91, %92 : vector<1x8xf32>
    %cst_73 = arith.constant 9.99999974E-6 : f32
    %94 = vector.broadcast %cst_73 : f32 to vector<1x8xf32>
    %95 = arith.addf %93, %94 : vector<1x8xf32>
    %96 = math.rsqrt %95 : vector<1x8xf32>
    %97 = arith.mulf %59, %96 : vector<1x8xf32>
    %98 = arith.mulf %89, %97 : vector<1x8xf32>
    %99 = arith.subf %60, %98 : vector<1x8xf32>
    %cst_74 = arith.constant dense<0.000000e+00> : vector<1x128xf32>
    %100 = tpu.matmul %97, %1, %cst_74 {dimension_numbers = #tpu.dot_dimension_numbers<[1], [0], [0], [1], [0, 0, 1, 1], [], []>} : vector<1x8xf32>, vector<8x128xf32>, vector<1x128xf32> -> vector<1x128xf32>
    %cst_75 = arith.constant dense<0.000000e+00> : vector<1x128xf32>
    %101 = tpu.matmul %99, %1, %cst_75 {dimension_numbers = #tpu.dot_dimension_numbers<[1], [0], [0], [1], [0, 0, 1, 1], [], []>} : vector<1x8xf32>, vector<8x128xf32>, vector<1x128xf32> -> vector<1x128xf32>
    %102 = vector.broadcast %100 : vector<1x128xf32> to vector<32x128xf32>
    %103 = arith.mulf %80, %102 : vector<32x128xf32>
    %104 = vector.broadcast %101 : vector<1x128xf32> to vector<32x128xf32>
    %105 = arith.addf %103, %104 : vector<32x128xf32>
    %cst_76 = arith.constant 0.000000e+00 : f32
    %106 = vector.broadcast %cst_76 : f32 to vector<32x128xf32>
    %107 = arith.maximumf %105, %106 : vector<32x128xf32>
    %c0_77 = arith.constant 0 : index
    %c0_78 = arith.constant 0 : index
    %108 = vector.load %arg9[%c0_77, %c0_78] : memref<32x128xf32, #tpu.memory_space<vmem>>, vector<32x128xf32>
    tpu.vector_store %arg9[%c0_77, %c0_78], %107 {strides = array<i32>} : memref<32x128xf32, #tpu.memory_space<vmem>>, vector<32x128xf32>,
    return
  }
}

</mosaic_0001>

<llo_original>
// kernel: tpu_custom_call.1
$region0: #{tpu_custom_call.1}
  #allocation0 [shape = 'u32[]', space=smem, size = 0x4, offset = 0x4, fixed_abs, tag = 'smem constant byte address 0x4 - core index']
  #allocation1 [shape = 'u32[144,128]{1,0:T(1,128)}', space=vmem, size = 0x12000, scoped, tag = 'internal scratch']
  #allocation2 [shape = 'f32[2,18,72]{2,1,0:T(8,128)}', space=vmem, size = 0x6000, scoped, tag = 'scratch operand']
  #allocation3 [shape = 'f32[2,18,144]{2,1,0:T(8,128)}', space=vmem, size = 0xc000, scoped, tag = 'scratch operand']
  %s0 = inlined_call_operand.vmem [shape: f32[2,16,64], index: 0, kind: input, shape index: {}]
  %s1 = inlined_call_operand.hbm [shape: f32[3,72,128], index: 1, kind: input, shape index: {}]
  %s2 = inlined_call_operand.hbm [shape: f32[3,144,128], index: 2, kind: input, shape index: {}]
  %s3 = inlined_call_operand.vmem [shape: f32[1,8], index: 3, kind: input, shape index: {}]
  %s4 = inlined_call_operand.vmem [shape: f32[1,8], index: 4, kind: input, shape index: {}]
  %s5 = inlined_call_operand.vmem [shape: f32[1,8], index: 5, kind: input, shape index: {}]
  %s6 = inlined_call_operand.vmem [shape: f32[1,8], index: 6, kind: input, shape index: {}]
  %s7 = inlined_call_operand.vmem [shape: f32[128,8], index: 7, kind: input, shape index: {}]
  %s8 = inlined_call_operand.vmem [shape: f32[8,128], index: 8, kind: input, shape index: {}]
  %s9 = inlined_call_operand.hbm [shape: f32[32,128], index: 9, kind: output, shape index: {}]
  %s10 = sld [smem:[#allocation0]]
  $region54: #{tpu_custom_call.1} parent=0
    _
  %s12 = ssub.s32 1, %s10
  %s13 = scalar_select 0, %s12, %s10
  $region1: #{tpu_custom_call.1} parent=0
    #allocation4 [shape = 'u8[110592]{0}', space=vmem, size = 0x1b000, scoped, tag = 'input window, operand 1, single buffered']
    #allocation5 [shape = 's32[1]{0}', space=sflag, size = 0x4, scoped, tag = 'scoped memory for tpu_custom_call.1']
    #allocation6 [shape = 's32[1]{0}', space=sflag, size = 0x4, scoped, tag = 'scoped memory for tpu_custom_call.1']
    #allocation7 [shape = 'u8[221184]{0}', space=vmem, size = 0x36000, scoped, tag = 'input window, operand 2, single buffered']
    #allocation8 [shape = 's32[1]{0}', space=sflag, size = 0x4, scoped, tag = 'scoped memory for tpu_custom_call.1']
    #allocation9 [shape = 'u8[16384]{0}', space=vmem, size = 0x4000, scoped, tag = 'output window, operand 0, single buffered']
    %14 = vsyncpa [#allocation5], 0
    %15 = vsyncpa [#allocation8], 0
    %16 = vsyncpa [#allocation6], 0
    // Predicated region
    $region2: #{tpu_custom_call.1} parent=1 // pred_check
      _
    $region3: #{tpu_custom_call.1} parent=1 // pred_check_branch
      %18 = sbr.rel (0) target = $region5
    $region4: #{tpu_custom_call.1} parent=1 // pred_region
      _
    $region5: #{tpu_custom_call.1} parent=1 // pred_fallthru
      _
    // Predicated region
    $region6: #{tpu_custom_call.1} parent=1 // pred_check
      _
    $region7: #{tpu_custom_call.1} parent=1 // pred_check_branch
      %20 = sbr.rel (0) target = $region9
    $region8: #{tpu_custom_call.1} parent=1 // pred_region
      %s22 = ssub.s32 3456, 3456
      %23 = vsyncadd [#allocation5], %s22
      %s24 = sshll.u32 [#allocation4], 4
      %s25 = int_to_ptr.vmem [resolvable:$true] %s24
      %30 = dma.hbm_to_vmem [thread:$0]  %s1, 3456, %s25, [#allocation5], 128, 128, 8
    $region9: #{tpu_custom_call.1} parent=1 // pred_fallthru
      _
    // Predicated region
    $region10: #{tpu_custom_call.1} parent=1 // pred_check
      _
    $region11: #{tpu_custom_call.1} parent=1 // pred_check_branch
      %32 = sbr.rel (0) target = $region13
    $region12: #{tpu_custom_call.1} parent=1 // pred_region
      %s34 = ssub.s32 6912, 6912
      %35 = vsyncadd [#allocation8], %s34
      %s36 = sshll.u32 [#allocation7], 4
      %s37 = int_to_ptr.vmem [resolvable:$true] %s36
      %42 = dma.hbm_to_vmem [thread:$0]  %s2, 6912, %s37, [#allocation8], 128, 128, 8
    $region13: #{tpu_custom_call.1} parent=1 // pred_fallthru
      _
    // Predicated region
    $region14: #{tpu_custom_call.1} parent=1 // pred_check
      _
    $region15: #{tpu_custom_call.1} parent=1 // pred_check_branch
      %44 = sbr.rel (0) target = $region17
    $region16: #{tpu_custom_call.1} parent=1 // pred_region
      _
    $region17: #{tpu_custom_call.1} parent=1 // pred_fallthru
      _
    // Predicated region
    $region18: #{tpu_custom_call.1} parent=1 // pred_check
      _
    $region19: #{tpu_custom_call.1} parent=1 // pred_check_branch
      %46 = sbr.rel (0) target = $region21
    $region20: #{tpu_custom_call.1} parent=1 // pred_region
      _
    $region21: #{tpu_custom_call.1} parent=1 // pred_fallthru
      _
    // Predicated region
    $region22: #{tpu_custom_call.1} parent=1 // pred_check
      _
    $region23: #{tpu_custom_call.1} parent=1 // pred_check_branch
      %48 = sbr.rel (0) target = $region25
    $region24: #{tpu_custom_call.1} parent=1 // pred_region
      _
    $region25: #{tpu_custom_call.1} parent=1 // pred_fallthru
      _
    // Predicated region
    $region26: #{tpu_custom_call.1} parent=1 // pred_check
      _
    $region27: #{tpu_custom_call.1} parent=1 // pred_check_branch
      %50 = sbr.rel (0) target = $region29
    $region28: #{tpu_custom_call.1} parent=1 // pred_region
      _
    $region29: #{tpu_custom_call.1} parent=1 // pred_fallthru
      _
    // Predicated region
    $region30: #{tpu_custom_call.1} parent=1 // pred_check
      _
    $region31: #{tpu_custom_call.1} parent=1 // pred_check_branch
      %52 = sbr.rel (0) target = $region33
    $region32: #{tpu_custom_call.1} parent=1 // pred_region
      _
    $region33: #{tpu_custom_call.1} parent=1 // pred_fallthru
      _
    // Predicated region
    $region34: #{tpu_custom_call.1} parent=1 // pred_check
      _
    $region35: #{tpu_custom_call.1} parent=1 // pred_check_branch
      %54 = sbr.rel (0) target = $region37
    $region36: #{tpu_custom_call.1} parent=1 // pred_region
      _
    $region37: #{tpu_custom_call.1} parent=1 // pred_fallthru
      _
    // Predicated region
    $region38: #{tpu_custom_call.1} parent=1 // pred_check
      _
    $region39: #{tpu_custom_call.1} parent=1 // pred_check_branch
      %56 = sbr.rel (0) target = $region41
    $region40: #{tpu_custom_call.1} parent=1 // pred_region
      %57 = dma.done [#allocation5], 3456
    $region41: #{tpu_custom_call.1} parent=1 // pred_fallthru
      _
    // Predicated region
    $region42: #{tpu_custom_call.1} parent=1 // pred_check
      _
    $region43: #{tpu_custom_call.1} parent=1 // pred_check_branch
      %59 = sbr.rel (0) target = $region45
    $region44: #{tpu_custom_call.1} parent=1 // pred_region
      %60 = dma.done [#allocation8], 6912
    $region45: #{tpu_custom_call.1} parent=1 // pred_fallthru
      _
    %v61 = vld [vmem:[%s7] sm:$0xff]
    %v62 = vld [vmem:[%s7 + $0x8] sm:$0xff]
    %v63 = vld [vmem:[%s7 + $0x10] sm:$0xff]
    %v64 = vld [vmem:[%s7 + $0x18] sm:$0xff]
    %v65 = vld [vmem:[%s7 + $0x20] sm:$0xff]
    %v66 = vld [vmem:[%s7 + $0x28] sm:$0xff]
    %v67 = vld [vmem:[%s7 + $0x30] sm:$0xff]
    %v68 = vld [vmem:[%s7 + $0x38] sm:$0xff]
    %v69 = vld [vmem:[%s7 + $0x40] sm:$0xff]
    %v70 = vld [vmem:[%s7 + $0x48] sm:$0xff]
    %v71 = vld [vmem:[%s7 + $0x50] sm:$0xff]
    %v72 = vld [vmem:[%s7 + $0x58] sm:$0xff]
    %v73 = vld [vmem:[%s7 + $0x60] sm:$0xff]
    %v74 = vld [vmem:[%s7 + $0x68] sm:$0xff]
    %v75 = vld [vmem:[%s7 + $0x70] sm:$0xff]
    %v76 = vld [vmem:[%s7 + $0x78] sm:$0xff]
    %v77 = vld [vmem:[%s8] sm:$0xff]
    %vm78 = vcmask 588800
    %79 = vst.msk [vmem:[#allocation2] sm:$0xff] %vm78, 0.0
    %80 = vst.msk [vmem:[#allocation2 + $0x8] sm:$0xff] %vm78, 0.0
    %vm81 = vcmask 582656
    %82 = vst.msk [vmem:[#allocation2 + $0x10] sm:$0x3] %vm81, 0.0
    %83 = vst.msk [vmem:[#allocation2 + $0x18] sm:$0xff] %vm78, 0.0
    %84 = vst.msk [vmem:[#allocation2 + $0x20] sm:$0xff] %vm78, 0.0
    %85 = vst.msk [vmem:[#allocation2 + $0x28] sm:$0x3] %vm81, 0.0
    %v86 = vld [vmem:[%s0] sm:$0xff]
    %v87 = vld [vmem:[%s0 + $0x8] sm:$0xff]
    %v88 = vld [vmem:[%s0 + $0x10] sm:$0xff]
    %v89 = vld [vmem:[%s0 + $0x18] sm:$0xff]
    %vm90 = vcmask 523264
    %91 = vst.msk [vmem:[#allocation2 + $0x1] sm:$0xff] %vm90, %v86
    %92 = vst.msk [vmem:[#allocation2 + $0x9] sm:$0xff] %vm90, %v87
    %93 = vst.msk [vmem:[#allocation2 + $0x19] sm:$0xff] %vm90, %v88
    %94 = vst.msk [vmem:[#allocation2 + $0x21] sm:$0xff] %vm90, %v89
    %v95 = vld [vmem:[%s3] sm:$0x1]
    %v96 = vld [vmem:[%s4] sm:$0x1]
    %v97 = vld [vmem:[#allocation2] sm:$0xff]
    %v98 = vld [vmem:[#allocation2 + $0x8] sm:$0xff]
    %v99 = vld [vmem:[#allocation2 + $0x10] sm:$0x3]
    %v100 = vld [vmem:[#allocation2 + $0x18] sm:$0xff]
    %v101 = vld [vmem:[#allocation2 + $0x20] sm:$0xff]
    %v102 = vld [vmem:[#allocation2 + $0x28] sm:$0x3]
    %v103 = vld [vmem:[#allocation4] sm:$0xff]
    %v104 = vld [vmem:[#allocation4 + $0x8] sm:$0xff]
    %v105 = vld [vmem:[#allocation4 + $0x10] sm:$0xff]
    %v106 = vld [vmem:[#allocation4 + $0x18] sm:$0xff]
    %v107 = vld [vmem:[#allocation4 + $0x20] sm:$0xff]
    %v108 = vld [vmem:[#allocation4 + $0x28] sm:$0xff]
    %v109 = vld [vmem:[#allocation4 + $0x30] sm:$0xff]
    %v110 = vld [vmem:[#allocation4 + $0x38] sm:$0xff]
    %v111 = vld [vmem:[#allocation4 + $0x40] sm:$0xff]
    %vm118 = vcmask 1046528
    %v119 = vrot.slane %v97, 1
    %v120 = vrot.slane %v98, 1
    %v121 = vsel %vm118, %v119, %v120
    %v122 = vrot.slane %v99, 1
    %v123 = vsel %vm118, %v120, %v122
    %v124 = vrot.slane %v100, 1
    %v125 = vrot.slane %v101, 1
    %v126 = vsel %vm118, %v124, %v125
    %v127 = vrot.slane %v102, 1
    %v128 = vsel %vm118, %v125, %v127
    %s129 = scalar_lea.vmem [#allocation4], 72
    %v130 = vld [vmem:[%s129] sm:$0xff]
    %v131 = vld [vmem:[%s129 + $0x8] sm:$0xff]
    %v132 = vld [vmem:[%s129 + $0x10] sm:$0xff]
    %v133 = vld [vmem:[%s129 + $0x18] sm:$0xff]
    %v134 = vld [vmem:[%s129 + $0x20] sm:$0xff]
    %v135 = vld [vmem:[%s129 + $0x28] sm:$0xff]
    %v136 = vld [vmem:[%s129 + $0x30] sm:$0xff]
    %v137 = vld [vmem:[%s129 + $0x38] sm:$0xff]
    %v138 = vld [vmem:[%s129 + $0x40] sm:$0xff]
    %v139 = vsel %vm78, %v121, 0
    %v141 = vsel %vm78, %v123, 0
    %v143 = vsel %vm78, %v126, 0
    %v145 = vsel %vm78, %v128, 0
    %147 = vmatprep.subr.mxu0 0.0
    %148 = vmatpush1.msra.mxu0 %v130
    %149 = vmatprep.subr.mxu0 0.0
    %150 = vmatpush1.msra.mxu0 %v131
    %151 = vmatprep.subr.mxu0 0.0
    %152 = vmatpush1.msra.mxu0 %v132
    %153 = vmatprep.subr.mxu0 0.0
    %154 = vmatpush1.msra.mxu0 %v133
    %155 = vmatprep.subr.mxu0 0.0
    %156 = vmatpush1.msra.mxu0 %v134
    %157 = vmatprep.subr.mxu0 0.0
    %158 = vmatpush1.msra.mxu0 %v135
    %159 = vmatprep.subr.mxu0 0.0
    %160 = vmatpush1.msra.mxu0 %v136
    %161 = vmatprep.subr.mxu0 0.0
    %162 = vmatpush1.msra.mxu0 %v137
    %163 = vmatprep.subr.mxu0 0.0
    %164 = vmatpush1.msra.mxu0 %v138
    %165 = vmatprep.subr.mxu0 0.0
    %166 = vmatpush1.msra.mxu0 0.0
    %167 = vmatprep.subr.mxu0 0.0
    %168 = vmatpush1.msra.mxu0 0.0
    %169 = vmatprep.subr.mxu0 0.0
    %170 = vmatpush1.msra.mxu0 0.0
    %171 = vmatprep.subr.mxu0 0.0
    %172 = vmatpush1.msra.mxu0 0.0
    %173 = vmatprep.subr.mxu0 0.0
    %174 = vmatpush1.msra.mxu0 0.0
    %175 = vmatprep.subr.mxu0 0.0
    %176 = vmatpush1.msra.mxu0 0.0
    %177 = vmatprep.subr.mxu0 0.0
    %178 = vmatpush1.msra.mxu0 0.0
    %179 = vmatprep.subr.mxu0 0.0
    %180 = vmatpush1.msra.mxu0 0.0
    %181 = vmatprep.subr.mxu0 0.0
    %182 = vmatpush1.msra.mxu0 0.0
    %183 = vmatprep.subr.mxu0 0.0
    %184 = vmatpush1.msra.mxu0 0.0
    %185 = vmatprep.subr.mxu0 0.0
    %186 = vmatpush1.msra.mxu0 0.0
    %187 = vmatprep.subr.mxu0 0.0
    %188 = vmatpush1.msra.mxu0 0.0
    %189 = vmatprep.subr.mxu0 0.0
    %190 = vmatpush1.msra.mxu0 0.0
    %191 = vmatprep.subr.mxu0 0.0
    %192 = vmatpush1.msra.mxu0 0.0
    %193 = vmatprep.subr.mxu0 0.0
    %194 = vmatpush1.msra.mxu0 0.0
    %195 = vmatprep.subr.mxu0 0.0
    %196 = vmatpush1.msra.mxu0 0.0
    %197 = vmatprep.subr.mxu0 0.0
    %198 = vmatpush1.msra.mxu0 0.0
    %199 = vmatprep.subr.mxu0 0.0
    %200 = vmatpush1.msra.mxu0 0.0
    %201 = vmatprep.subr.mxu0 0.0
    %202 = vmatpush1.msra.mxu0 0.0
    %203 = vmatprep.subr.mxu0 0.0
    %204 = vmatpush1.msra.mxu0 0.0
    %205 = vmatprep.subr.mxu0 0.0
    %206 = vmatpush1.msra.mxu0 0.0
    %207 = vmatprep.subr.mxu0 0.0
    %208 = vmatpush1.msra.mxu0 0.0
    %209 = vmatprep.subr.mxu0 0.0
    %210 = vmatpush1.msra.mxu0 0.0
    %211 = vmatprep.mubr.f32.mxu0 0.0
    %212 = vmatmul.mubr.f32.gmra.mrb[0].mxu0 %v139
    %v213 = vpop.f32.mrb[0].mxu0
    %v214 = vadd.f32 0.0, %v213
    %v215 = vpop.f32.mrb[0].mxu0
    %216 = vmatprep.mubr.f32.mxu0 0.0
    %217 = vmatmul.mubr.f32.gmra.mrb[0].mxu0 %v141
    %v218 = vpop.f32.mrb[0].mxu0
    %v219 = vadd.f32 0.0, %v218
    %v220 = vpop.f32.mrb[0].mxu0
    %221 = vmatprep.mubr.f32.mxu0 0.0
    %222 = vmatmul.mubr.f32.gmra.mrb[0].mxu0 %v143
    %v223 = vpop.f32.mrb[0].mxu0
    %v224 = vadd.f32 0.0, %v223
    %v225 = vpop.f32.mrb[0].mxu0
    %226 = vmatprep.mubr.f32.mxu0 0.0
    %227 = vmatmul.mubr.f32.gmra.mrb[0].mxu0 %v145
    %v228 = vpop.f32.mrb[0].mxu0
    %v229 = vadd.f32 0.0, %v228
    %v230 = vpop.f32.mrb[0].mxu0
    %231 = vdwg.mxu0
    %v232 = vsel %vm78, %v97, 0
    %v234 = vsel %vm78, %v98, 0
    %v236 = vsel %vm78, %v100, 0
    %v238 = vsel %vm78, %v101, 0
    %240 = vmatprep.subr.mxu0 0.0
    %241 = vmatpush1.msra.mxu0 %v103
    %242 = vmatprep.subr.mxu0 0.0
    %243 = vmatpush1.msra.mxu0 %v104
    %244 = vmatprep.subr.mxu0 0.0
    %245 = vmatpush1.msra.mxu0 %v105
    %246 = vmatprep.subr.mxu0 0.0
    %247 = vmatpush1.msra.mxu0 %v106
    %248 = vmatprep.subr.mxu0 0.0
    %249 = vmatpush1.msra.mxu0 %v107
    %250 = vmatprep.subr.mxu0 0.0
    %251 = vmatpush1.msra.mxu0 %v108
    %252 = vmatprep.subr.mxu0 0.0
    %253 = vmatpush1.msra.mxu0 %v109
    %254 = vmatprep.subr.mxu0 0.0
    %255 = vmatpush1.msra.mxu0 %v110
    %256 = vmatprep.subr.mxu0 0.0
    %257 = vmatpush1.msra.mxu0 %v111
    %258 = vmatprep.subr.mxu0 0.0
    %259 = vmatpush1.msra.mxu0 0.0
    %260 = vmatprep.subr.mxu0 0.0
    %261 = vmatpush1.msra.mxu0 0.0
    %262 = vmatprep.subr.mxu0 0.0
    %263 = vmatpush1.msra.mxu0 0.0
    %264 = vmatprep.subr.mxu0 0.0
    %265 = vmatpush1.msra.mxu0 0.0
    %266 = vmatprep.subr.mxu0 0.0
    %267 = vmatpush1.msra.mxu0 0.0
    %268 = vmatprep.subr.mxu0 0.0
    %269 = vmatpush1.msra.mxu0 0.0
    %270 = vmatprep.subr.mxu0 0.0
    %271 = vmatpush1.msra.mxu0 0.0
    %272 = vmatprep.subr.mxu0 0.0
    %273 = vmatpush1.msra.mxu0 0.0
    %274 = vmatprep.subr.mxu0 0.0
    %275 = vmatpush1.msra.mxu0 0.0
    %276 = vmatprep.subr.mxu0 0.0
    %277 = vmatpush1.msra.mxu0 0.0
    %278 = vmatprep.subr.mxu0 0.0
    %279 = vmatpush1.msra.mxu0 0.0
    %280 = vmatprep.subr.mxu0 0.0
    %281 = vmatpush1.msra.mxu0 0.0
    %282 = vmatprep.subr.mxu0 0.0
    %283 = vmatpush1.msra.mxu0 0.0
    %284 = vmatprep.subr.mxu0 0.0
    %285 = vmatpush1.msra.mxu0 0.0
    %286 = vmatprep.subr.mxu0 0.0
    %287 = vmatpush1.msra.mxu0 0.0
    %288 = vmatprep.subr.mxu0 0.0
    %289 = vmatpush1.msra.mxu0 0.0
    %290 = vmatprep.subr.mxu0 0.0
    %291 = vmatpush1.msra.mxu0 0.0
    %292 = vmatprep.subr.mxu0 0.0
    %293 = vmatpush1.msra.mxu0 0.0
    %294 = vmatprep.subr.mxu0 0.0
    %295 = vmatpush1.msra.mxu0 0.0
    %296 = vmatprep.subr.mxu0 0.0
    %297 = vmatpush1.msra.mxu0 0.0
    %298 = vmatprep.subr.mxu0 0.0
    %299 = vmatpush1.msra.mxu0 0.0
    %300 = vmatprep.subr.mxu0 0.0
    %301 = vmatpush1.msra.mxu0 0.0
    %302 = vmatprep.subr.mxu0 0.0
    %303 = vmatpush1.msra.mxu0 0.0
    %304 = vmatprep.mubr.f32.mxu0 0.0
    %305 = vmatmul.mubr.f32.gmra.mrb[0].mxu0 %v232
    %v306 = vpop.f32.mrb[0].mxu0
    %v307 = vadd.f32 %v214, %v306
    %v308 = vpop.f32.mrb[0].mxu0
    %309 = vmatprep.mubr.f32.mxu0 0.0
    %310 = vmatmul.mubr.f32.gmra.mrb[0].mxu0 %v234
    %v311 = vpop.f32.mrb[0].mxu0
    %v312 = vadd.f32 %v219, %v311
    %v313 = vpop.f32.mrb[0].mxu0
    %314 = vmatprep.mubr.f32.mxu0 0.0
    %315 = vmatmul.mubr.f32.gmra.mrb[0].mxu0 %v236
    %v316 = vpop.f32.mrb[0].mxu0
    %v317 = vadd.f32 %v224, %v316
    %v318 = vpop.f32.mrb[0].mxu0
    %319 = vmatprep.mubr.f32.mxu0 0.0
    %320 = vmatmul.mubr.f32.gmra.mrb[0].mxu0 %v238
    %v321 = vpop.f32.mrb[0].mxu0
    %v322 = vadd.f32 %v229, %v321
    %v323 = vpop.f32.mrb[0].mxu0
    %324 = vdwg.mxu0
    %vm325 = vcmask 1045504
    %v326 = vrot.slane %v97, 2
    %v327 = vrot.slane %v98, 2
    %v328 = vsel %vm325, %v326, %v327
    %v329 = vrot.slane %v99, 2
    %v330 = vsel %vm325, %v327, %v329
    %v331 = vrot.slane %v100, 2
    %v332 = vrot.slane %v101, 2
    %v333 = vsel %vm325, %v331, %v332
    %v334 = vrot.slane %v102, 2
    %v335 = vsel %vm325, %v332, %v334
    %s336 = scalar_lea.vmem [#allocation4], 144
    %v337 = vld [vmem:[%s336] sm:$0xff]
    %v338 = vld [vmem:[%s336 + $0x8] sm:$0xff]
    %v339 = vld [vmem:[%s336 + $0x10] sm:$0xff]
    %v340 = vld [vmem:[%s336 + $0x18] sm:$0xff]
    %v341 = vld [vmem:[%s336 + $0x20] sm:$0xff]
    %v342 = vld [vmem:[%s336 + $0x28] sm:$0xff]
    %v343 = vld [vmem:[%s336 + $0x30] sm:$0xff]
    %v344 = vld [vmem:[%s336 + $0x38] sm:$0xff]
    %v345 = vld [vmem:[%s336 + $0x40] sm:$0xff]
    %v346 = vsel %vm78, %v328, 0
    %v348 = vsel %vm78, %v330, 0
    %v350 = vsel %vm78, %v333, 0
    %v352 = vsel %vm78, %v335, 0
    %354 = vmatprep.subr.mxu0 0.0
    %355 = vmatpush1.msra.mxu0 %v337
    %356 = vmatprep.subr.mxu0 0.0
    %357 = vmatpush1.msra.mxu0 %v338
    %358 = vmatprep.subr.mxu0 0.0
    %359 = vmatpush1.msra.mxu0 %v339
    %360 = vmatprep.subr.mxu0 0.0
    %361 = vmatpush1.msra.mxu0 %v340
    %362 = vmatprep.subr.mxu0 0.0
    %363 = vmatpush1.msra.mxu0 %v341
    %364 = vmatprep.subr.mxu0 0.0
    %365 = vmatpush1.msra.mxu0 %v342
    %366 = vmatprep.subr.mxu0 0.0
    %367 = vmatpush1.msra.mxu0 %v343
    %368 = vmatprep.subr.mxu0 0.0
    %369 = vmatpush1.msra.mxu0 %v344
    %370 = vmatprep.subr.mxu0 0.0
    %371 = vmatpush1.msra.mxu0 %v345
    %372 = vmatprep.subr.mxu0 0.0
    %373 = vmatpush1.msra.mxu0 0.0
    %374 = vmatprep.subr.mxu0 0.0
    %375 = vmatpush1.msra.mxu0 0.0
    %376 = vmatprep.subr.mxu0 0.0
    %377 = vmatpush1.msra.mxu0 0.0
    %378 = vmatprep.subr.mxu0 0.0
    %379 = vmatpush1.msra.mxu0 0.0
    %380 = vmatprep.subr.mxu0 0.0
    %381 = vmatpush1.msra.mxu0 0.0
    %382 = vmatprep.subr.mxu0 0.0
    %383 = vmatpush1.msra.mxu0 0.0
    %384 = vmatprep.subr.mxu0 0.0
    %385 = vmatpush1.msra.mxu0 0.0
    %386 = vmatprep.subr.mxu0 0.0
    %387 = vmatpush1.msra.mxu0 0.0
    %388 = vmatprep.subr.mxu0 0.0
    %389 = vmatpush1.msra.mxu0 0.0
    %390 = vmatprep.subr.mxu0 0.0
    %391 = vmatpush1.msra.mxu0 0.0
    %392 = vmatprep.subr.mxu0 0.0
    %393 = vmatpush1.msra.mxu0 0.0
    %394 = vmatprep.subr.mxu0 0.0
    %395 = vmatpush1.msra.mxu0 0.0
    %396 = vmatprep.subr.mxu0 0.0
    %397 = vmatpush1.msra.mxu0 0.0
    %398 = vmatprep.subr.mxu0 0.0
    %399 = vmatpush1.msra.mxu0 0.0
    %400 = vmatprep.subr.mxu0 0.0
    %401 = vmatpush1.msra.mxu0 0.0
    %402 = vmatprep.subr.mxu0 0.0
    %403 = vmatpush1.msra.mxu0 0.0
    %404 = vmatprep.subr.mxu0 0.0
    %405 = vmatpush1.msra.mxu0 0.0
    %406 = vmatprep.subr.mxu0 0.0
    %407 = vmatpush1.msra.mxu0 0.0
    %408 = vmatprep.subr.mxu0 0.0
    %409 = vmatpush1.msra.mxu0 0.0
    %410 = vmatprep.subr.mxu0 0.0
    %411 = vmatpush1.msra.mxu0 0.0
    %412 = vmatprep.subr.mxu0 0.0
    %413 = vmatpush1.msra.mxu0 0.0
    %414 = vmatprep.subr.mxu0 0.0
    %415 = vmatpush1.msra.mxu0 0.0
    %416 = vmatprep.subr.mxu0 0.0
    %417 = vmatpush1.msra.mxu0 0.0
    %418 = vmatprep.mubr.f32.mxu0 0.0
    %419 = vmatmul.mubr.f32.gmra.mrb[0].mxu0 %v346
    %v420 = vpop.f32.mrb[0].mxu0
    %v421 = vadd.f32 0.0, %v420
    %v422 = vpop.f32.mrb[0].mxu0
    %423 = vmatprep.mubr.f32.mxu0 0.0
    %424 = vmatmul.mubr.f32.gmra.mrb[0].mxu0 %v348
    %v425 = vpop.f32.mrb[0].mxu0
    %v426 = vadd.f32 0.0, %v425
    %v427 = vpop.f32.mrb[0].mxu0
    %428 = vmatprep.mubr.f32.mxu0 0.0
    %429 = vmatmul.mubr.f32.gmra.mrb[0].mxu0 %v350
    %v430 = vpop.f32.mrb[0].mxu0
    %v431 = vadd.f32 0.0, %v430
    %v432 = vpop.f32.mrb[0].mxu0
    %433 = vmatprep.mubr.f32.mxu0 0.0
    %434 = vmatmul.mubr.f32.gmra.mrb[0].mxu0 %v352
    %v435 = vpop.f32.mrb[0].mxu0
    %v436 = vadd.f32 0.0, %v435
    %v437 = vpop.f32.mrb[0].mxu0
    %438 = vdwg.mxu0
    %v439 = vadd.f32 %v307, %v421
    %v440 = vadd.f32 %v312, %v426
    %v441 = vadd.f32 %v317, %v431
    %v442 = vadd.f32 %v322, %v436
    %v443 = vadd.f32 %v439, %v440
    %v444 = vadd.f32 %v443, %v441
    %v445 = vadd.f32 %v444, %v442
    %v446 = vrot.slane %v445, 4
    %v447 = vadd.f32 %v445, %v446
    %v448 = vrot.slane %v447, 2
    %v449 = vadd.f32 %v447, %v448
    %v450 = vrot.slane %v449, 1
    %v451 = vadd.f32 %v449, %v450
    %v452 = vmul.f32 %v439, %v439
    %v453 = vmul.f32 %v440, %v440
    %v454 = vmul.f32 %v441, %v441
    %v455 = vmul.f32 %v442, %v442
    %v456 = vadd.f32 %v452, %v453
    %v457 = vadd.f32 %v456, %v454
    %v458 = vadd.f32 %v457, %v455
    %v459 = vrot.slane %v458, 4
    %v460 = vadd.f32 %v458, %v459
    %v461 = vrot.slane %v460, 2
    %v462 = vadd.f32 %v460, %v461
    %v463 = vrot.slane %v462, 1
    %v464 = vadd.f32 %v462, %v463
    %465 = vmatprep.subr.mxu0 0.0
    %466 = vmatpush1.msra.mxu0 %v61
    %467 = vmatprep.subr.mxu0 0.0
    %468 = vmatpush1.msra.mxu0 %v62
    %469 = vmatprep.subr.mxu0 0.0
    %470 = vmatpush1.msra.mxu0 %v63
    %471 = vmatprep.subr.mxu0 0.0
    %472 = vmatpush1.msra.mxu0 %v64
    %473 = vmatprep.subr.mxu0 0.0
    %474 = vmatpush1.msra.mxu0 %v65
    %475 = vmatprep.subr.mxu0 0.0
    %476 = vmatpush1.msra.mxu0 %v66
    %477 = vmatprep.subr.mxu0 0.0
    %478 = vmatpush1.msra.mxu0 %v67
    %479 = vmatprep.subr.mxu0 0.0
    %480 = vmatpush1.msra.mxu0 %v68
    %481 = vmatprep.subr.mxu0 0.0
    %482 = vmatpush1.msra.mxu0 %v69
    %483 = vmatprep.subr.mxu0 0.0
    %484 = vmatpush1.msra.mxu0 %v70
    %485 = vmatprep.subr.mxu0 0.0
    %486 = vmatpush1.msra.mxu0 %v71
    %487 = vmatprep.subr.mxu0 0.0
    %488 = vmatpush1.msra.mxu0 %v72
    %489 = vmatprep.subr.mxu0 0.0
    %490 = vmatpush1.msra.mxu0 %v73
    %491 = vmatprep.subr.mxu0 0.0
    %492 = vmatpush1.msra.mxu0 %v74
    %493 = vmatprep.subr.mxu0 0.0
    %494 = vmatpush1.msra.mxu0 %v75
    %495 = vmatprep.subr.mxu0 0.0
    %496 = vmatpush1.msra.mxu0 %v76
    %497 = vmatprep.subr.mxu0 0.0
    %498 = vmatpush1.msra.mxu0 0.0
    %499 = vmatprep.subr.mxu0 0.0
    %500 = vmatpush1.msra.mxu0 0.0
    %501 = vmatprep.subr.mxu0 0.0
    %502 = vmatpush1.msra.mxu0 0.0
    %503 = vmatprep.subr.mxu0 0.0
    %504 = vmatpush1.msra.mxu0 0.0
    %505 = vmatprep.subr.mxu0 0.0
    %506 = vmatpush1.msra.mxu0 0.0
    %507 = vmatprep.subr.mxu0 0.0
    %508 = vmatpush1.msra.mxu0 0.0
    %509 = vmatprep.subr.mxu0 0.0
    %510 = vmatpush1.msra.mxu0 0.0
    %511 = vmatprep.subr.mxu0 0.0
    %512 = vmatpush1.msra.mxu0 0.0
    %513 = vmatprep.subr.mxu0 0.0
    %514 = vmatpush1.msra.mxu0 0.0
    %515 = vmatprep.subr.mxu0 0.0
    %516 = vmatpush1.msra.mxu0 0.0
    %517 = vmatprep.subr.mxu0 0.0
    %518 = vmatpush1.msra.mxu0 0.0
    %519 = vmatprep.subr.mxu0 0.0
    %520 = vmatpush1.msra.mxu0 0.0
    %521 = vmatprep.subr.mxu0 0.0
    %522 = vmatpush1.msra.mxu0 0.0
    %523 = vmatprep.subr.mxu0 0.0
    %524 = vmatpush1.msra.mxu0 0.0
    %525 = vmatprep.subr.mxu0 0.0
    %526 = vmatpush1.msra.mxu0 0.0
    %527 = vmatprep.subr.mxu0 0.0
    %528 = vmatpush1.msra.mxu0 0.0
    %529 = vmatprep.mubr.f32.mxu0 0.0
    %530 = vmatmul.mubr.f32.gmra.mrb[0].mxu0 %v451
    %v531 = vpop.f32.mrb[0].mxu0
    %v532 = vadd.f32 0.0, %v531
    %v533 = vpop.f32.mrb[0].mxu0
    %534 = vdwg.mxu0
    %535 = vmatprep.subr.mxu0 0.0
    %536 = vmatpush1.msra.mxu0 %v61
    %537 = vmatprep.subr.mxu0 0.0
    %538 = vmatpush1.msra.mxu0 %v62
    %539 = vmatprep.subr.mxu0 0.0
    %540 = vmatpush1.msra.mxu0 %v63
    %541 = vmatprep.subr.mxu0 0.0
    %542 = vmatpush1.msra.mxu0 %v64
    %543 = vmatprep.subr.mxu0 0.0
    %544 = vmatpush1.msra.mxu0 %v65
    %545 = vmatprep.subr.mxu0 0.0
    %546 = vmatpush1.msra.mxu0 %v66
    %547 = vmatprep.subr.mxu0 0.0
    %548 = vmatpush1.msra.mxu0 %v67
    %549 = vmatprep.subr.mxu0 0.0
    %550 = vmatpush1.msra.mxu0 %v68
    %551 = vmatprep.subr.mxu0 0.0
    %552 = vmatpush1.msra.mxu0 %v69
    %553 = vmatprep.subr.mxu0 0.0
    %554 = vmatpush1.msra.mxu0 %v70
    %555 = vmatprep.subr.mxu0 0.0
    %556 = vmatpush1.msra.mxu0 %v71
    %557 = vmatprep.subr.mxu0 0.0
    %558 = vmatpush1.msra.mxu0 %v72
    %559 = vmatprep.subr.mxu0 0.0
    %560 = vmatpush1.msra.mxu0 %v73
    %561 = vmatprep.subr.mxu0 0.0
    %562 = vmatpush1.msra.mxu0 %v74
    %563 = vmatprep.subr.mxu0 0.0
    %564 = vmatpush1.msra.mxu0 %v75
    %565 = vmatprep.subr.mxu0 0.0
    %566 = vmatpush1.msra.mxu0 %v76
    %567 = vmatprep.subr.mxu0 0.0
    %568 = vmatpush1.msra.mxu0 0.0
    %569 = vmatprep.subr.mxu0 0.0
    %570 = vmatpush1.msra.mxu0 0.0
    %571 = vmatprep.subr.mxu0 0.0
    %572 = vmatpush1.msra.mxu0 0.0
    %573 = vmatprep.subr.mxu0 0.0
    %574 = vmatpush1.msra.mxu0 0.0
    %575 = vmatprep.subr.mxu0 0.0
    %576 = vmatpush1.msra.mxu0 0.0
    %577 = vmatprep.subr.mxu0 0.0
    %578 = vmatpush1.msra.mxu0 0.0
    %579 = vmatprep.subr.mxu0 0.0
    %580 = vmatpush1.msra.mxu0 0.0
    %581 = vmatprep.subr.mxu0 0.0
    %582 = vmatpush1.msra.mxu0 0.0
    %583 = vmatprep.subr.mxu0 0.0
    %584 = vmatpush1.msra.mxu0 0.0
    %585 = vmatprep.subr.mxu0 0.0
    %586 = vmatpush1.msra.mxu0 0.0
    %587 = vmatprep.subr.mxu0 0.0
    %588 = vmatpush1.msra.mxu0 0.0
    %589 = vmatprep.subr.mxu0 0.0
    %590 = vmatpush1.msra.mxu0 0.0
    %591 = vmatprep.subr.mxu0 0.0
    %592 = vmatpush1.msra.mxu0 0.0
    %593 = vmatprep.subr.mxu0 0.0
    %594 = vmatpush1.msra.mxu0 0.0
    %595 = vmatprep.subr.mxu0 0.0
    %596 = vmatpush1.msra.mxu0 0.0
    %597 = vmatprep.subr.mxu0 0.0
    %598 = vmatpush1.msra.mxu0 0.0
    %599 = vmatprep.mubr.f32.mxu0 0.0
    %600 = vmatmul.mubr.f32.gmra.mrb[0].mxu0 %v464
    %v601 = vpop.f32.mrb[0].mxu0
    %v602 = vadd.f32 0.0, %v601
    %v603 = vpop.f32.mrb[0].mxu0
    %604 = vdwg.mxu0
    %v605 = vmul.f32 %v532, 0.001953125
    %v606 = vmul.f32 %v602, 0.001953125
    %v607 = vmul.f32 %v605, %v605
    %v608 = vsub.f32 %v606, %v607
    %v609 = vadd.f32 %v608, 1e-05
    %v610 = vrsqrt.pop %v609
    %v611 = vmul.f32 %v95, %v610
    %v612 = vmul.f32 %v605, %v611
    %v613 = vsub.f32 %v96, %v612
    %vm614 = vcmask 64512
    %v616 = vsel %vm614, %v611, 0
    %618 = vmatprep.subr.mxu0 0.0
    %619 = vmatpush1.msra.mxu0 %v77
    %620 = vmatprep.subr.mxu0 0.0
    %621 = vmatpush1.msra.mxu0 0.0
    %622 = vmatprep.subr.mxu0 0.0
    %623 = vmatpush1.msra.mxu0 0.0
    %624 = vmatprep.subr.mxu0 0.0
    %625 = vmatpush1.msra.mxu0 0.0
    %626 = vmatprep.subr.mxu0 0.0
    %627 = vmatpush1.msra.mxu0 0.0
    %628 = vmatprep.subr.mxu0 0.0
    %629 = vmatpush1.msra.mxu0 0.0
    %630 = vmatprep.subr.mxu0 0.0
    %631 = vmatpush1.msra.mxu0 0.0
    %632 = vmatprep.subr.mxu0 0.0
    %633 = vmatpush1.msra.mxu0 0.0
    %634 = vmatprep.subr.mxu0 0.0
    %635 = vmatpush1.msra.mxu0 0.0
    %636 = vmatprep.subr.mxu0 0.0
    %637 = vmatpush1.msra.mxu0 0.0
    %638 = vmatprep.subr.mxu0 0.0
    %639 = vmatpush1.msra.mxu0 0.0
    %640 = vmatprep.subr.mxu0 0.0
    %641 = vmatpush1.msra.mxu0 0.0
    %642 = vmatprep.subr.mxu0 0.0
    %643 = vmatpush1.msra.mxu0 0.0
    %644 = vmatprep.subr.mxu0 0.0
    %645 = vmatpush1.msra.mxu0 0.0
    %646 = vmatprep.subr.mxu0 0.0
    %647 = vmatpush1.msra.mxu0 0.0
    %648 = vmatprep.subr.mxu0 0.0
    %649 = vmatpush1.msra.mxu0 0.0
    %650 = vmatprep.subr.mxu0 0.0
    %651 = vmatpush1.msra.mxu0 0.0
    %652 = vmatprep.subr.mxu0 0.0
    %653 = vmatpush1.msra.mxu0 0.0
    %654 = vmatprep.subr.mxu0 0.0
    %655 = vmatpush1.msra.mxu0 0.0
    %656 = vmatprep.subr.mxu0 0.0
    %657 = vmatpush1.msra.mxu0 0.0
    %658 = vmatprep.subr.mxu0 0.0
    %659 = vmatpush1.msra.mxu0 0.0
    %660 = vmatprep.subr.mxu0 0.0
    %661 = vmatpush1.msra.mxu0 0.0
    %662 = vmatprep.subr.mxu0 0.0
    %663 = vmatpush1.msra.mxu0 0.0
    %664 = vmatprep.subr.mxu0 0.0
    %665 = vmatpush1.msra.mxu0 0.0
    %666 = vmatprep.subr.mxu0 0.0
    %667 = vmatpush1.msra.mxu0 0.0
    %668 = vmatprep.subr.mxu0 0.0
    %669 = vmatpush1.msra.mxu0 0.0
    %670 = vmatprep.subr.mxu0 0.0
    %671 = vmatpush1.msra.mxu0 0.0
    %672 = vmatprep.subr.mxu0 0.0
    %673 = vmatpush1.msra.mxu0 0.0
    %674 = vmatprep.subr.mxu0 0.0
    %675 = vmatpush1.msra.mxu0 0.0
    %676 = vmatprep.subr.mxu0 0.0
    %677 = vmatpush1.msra.mxu0 0.0
    %678 = vmatprep.subr.mxu0 0.0
    %679 = vmatpush1.msra.mxu0 0.0
    %680 = vmatprep.subr.mxu0 0.0
    %681 = vmatpush1.msra.mxu0 0.0
    %682 = vmatprep.mubr.f32.mxu0 0.0
    %683 = vmatmul.mubr.f32.gmra.mrb[0].mxu0 %v616
    %v684 = vpop.f32.mrb[0].mxu0
    %v685 = vadd.f32 0.0, %v684
    %v686 = vpop.f32.mrb[0].mxu0
    %687 = vdwg.mxu0
    %v689 = vsel %vm614, %v613, 0
    %691 = vmatprep.subr.mxu0 0.0
    %692 = vmatpush1.msra.mxu0 %v77
    %693 = vmatprep.subr.mxu0 0.0
    %694 = vmatpush1.msra.mxu0 0.0
    %695 = vmatprep.subr.mxu0 0.0
    %696 = vmatpush1.msra.mxu0 0.0
    %697 = vmatprep.subr.mxu0 0.0
    %698 = vmatpush1.msra.mxu0 0.0
    %699 = vmatprep.subr.mxu0 0.0
    %700 = vmatpush1.msra.mxu0 0.0
    %701 = vmatprep.subr.mxu0 0.0
    %702 = vmatpush1.msra.mxu0 0.0
    %703 = vmatprep.subr.mxu0 0.0
    %704 = vmatpush1.msra.mxu0 0.0
    %705 = vmatprep.subr.mxu0 0.0
    %706 = vmatpush1.msra.mxu0 0.0
    %707 = vmatprep.subr.mxu0 0.0
    %708 = vmatpush1.msra.mxu0 0.0
    %709 = vmatprep.subr.mxu0 0.0
    %710 = vmatpush1.msra.mxu0 0.0
    %711 = vmatprep.subr.mxu0 0.0
    %712 = vmatpush1.msra.mxu0 0.0
    %713 = vmatprep.subr.mxu0 0.0
    %714 = vmatpush1.msra.mxu0 0.0
    %715 = vmatprep.subr.mxu0 0.0
    %716 = vmatpush1.msra.mxu0 0.0
    %717 = vmatprep.subr.mxu0 0.0
    %718 = vmatpush1.msra.mxu0 0.0
    %719 = vmatprep.subr.mxu0 0.0
    %720 = vmatpush1.msra.mxu0 0.0
    %721 = vmatprep.subr.mxu0 0.0
    %722 = vmatpush1.msra.mxu0 0.0
    %723 = vmatprep.subr.mxu0 0.0
    %724 = vmatpush1.msra.mxu0 0.0
    %725 = vmatprep.subr.mxu0 0.0
    %726 = vmatpush1.msra.mxu0 0.0
    %727 = vmatprep.subr.mxu0 0.0
    %728 = vmatpush1.msra.mxu0 0.0
    %729 = vmatprep.subr.mxu0 0.0
    %730 = vmatpush1.msra.mxu0 0.0
    %731 = vmatprep.subr.mxu0 0.0
    %732 = vmatpush1.msra.mxu0 0.0
    %733 = vmatprep.subr.mxu0 0.0
    %734 = vmatpush1.msra.mxu0 0.0
    %735 = vmatprep.subr.mxu0 0.0
    %736 = vmatpush1.msra.mxu0 0.0
    %737 = vmatprep.subr.mxu0 0.0
    %738 = vmatpush1.msra.mxu0 0.0
    %739 = vmatprep.subr.mxu0 0.0
    %740 = vmatpush1.msra.mxu0 0.0
    %741 = vmatprep.subr.mxu0 0.0
    %742 = vmatpush1.msra.mxu0 0.0
    %743 = vmatprep.subr.mxu0 0.0
    %744 = vmatpush1.msra.mxu0 0.0
    %745 = vmatprep.subr.mxu0 0.0
    %746 = vmatpush1.msra.mxu0 0.0
    %747 = vmatprep.subr.mxu0 0.0
    %748 = vmatpush1.msra.mxu0 0.0
    %749 = vmatprep.subr.mxu0 0.0
    %750 = vmatpush1.msra.mxu0 0.0
    %751 = vmatprep.subr.mxu0 0.0
    %752 = vmatpush1.msra.mxu0 0.0
    %753 = vmatprep.subr.mxu0 0.0
    %754 = vmatpush1.msra.mxu0 0.0
    %755 = vmatprep.mubr.f32.mxu0 0.0
    %756 = vmatmul.mubr.f32.gmra.mrb[0].mxu0 %v689
    %v757 = vpop.f32.mrb[0].mxu0
    %v758 = vadd.f32 0.0, %v757
    %v759 = vpop.f32.mrb[0].mxu0
    %760 = vdwg.mxu0
    %v761 = vlaneseq
    %v762 = vshrl.u32 %v761, 7
    %v763 = vsub.s32 0, %v762
    %v764 = vrot.slane %v685, %v763
    %v765 = vmul.f32 %v439, %v764
    %v766 = vmul.f32 %v440, %v764
    %v767 = vmul.f32 %v441, %v764
    %v768 = vmul.f32 %v442, %v764
    %v769 = vlaneseq
    %v770 = vshrl.u32 %v769, 7
    %v771 = vsub.s32 0, %v770
    %v772 = vrot.slane %v758, %v771
    %v773 = vadd.f32 %v765, %v772
    %v774 = vadd.f32 %v766, %v772
    %v775 = vadd.f32 %v767, %v772
    %v776 = vadd.f32 %v768, %v772
    %v777 = vmax.f32 %v773, 0.0
    %v778 = vmax.f32 %v774, 0.0
    %v779 = vmax.f32 %v775, 0.0
    %v780 = vmax.f32 %v776, 0.0
    %781 = vst [vmem:[#allocation3] sm:$0xff] 0.0
    %vm782 = vcmask 130048
    %783 = vst.msk [vmem:[#allocation3 + $0x8] sm:$0xff] %vm782, 0.0
    %784 = vst [vmem:[#allocation3 + $0x10] sm:$0xff] 0.0
    %785 = vst.msk [vmem:[#allocation3 + $0x18] sm:$0xff] %vm782, 0.0
    %786 = vst [vmem:[#allocation3 + $0x20] sm:$0x3] 0.0
    %vm787 = vcmask 123904
    %788 = vst.msk [vmem:[#allocation3 + $0x28] sm:$0x3] %vm787, 0.0
    %789 = vst [vmem:[#allocation3 + $0x30] sm:$0xff] 0.0
    %790 = vst.msk [vmem:[#allocation3 + $0x38] sm:$0xff] %vm782, 0.0
    %791 = vst [vmem:[#allocation3 + $0x40] sm:$0xff] 0.0
    %792 = vst.msk [vmem:[#allocation3 + $0x48] sm:$0xff] %vm782, 0.0
    %793 = vst [vmem:[#allocation3 + $0x50] sm:$0x3] 0.0
    %794 = vst.msk [vmem:[#allocation3 + $0x58] sm:$0x3] %vm787, 0.0
    %vm799 = vcmask 1040384
    %v800 = vrot.slane %v777, 7
    %v801 = vrot.slane %v778, 7
    %v802 = vsel %vm799, %v800, %v801
    %v803 = vrot.slane %v779, 7
    %v804 = vrot.slane %v780, 7
    %v805 = vsel %vm799, %v803, %v804
    %812 = vst [vmem:[#allocation3] sm:$0xfe] %v800
    %813 = vst [vmem:[#allocation3 + $0x10] sm:$0xff] %v802
    %814 = vst [vmem:[#allocation3 + $0x20] sm:$0x1] %v801
    %815 = vst [vmem:[#allocation3 + $0x30] sm:$0xfe] %v803
    %816 = vst [vmem:[#allocation3 + $0x40] sm:$0xff] %v805
    %817 = vst [vmem:[#allocation3 + $0x50] sm:$0x1] %v804
    %v818 = vld [vmem:[%s5] sm:$0x1]
    %v819 = vld [vmem:[%s6] sm:$0x1]
    %v820 = vld [vmem:[#allocation3] sm:$0xff]
    %v821 = vld [vmem:[#allocation3 + $0x8] sm:$0xff]
    %v822 = vld [vmem:[#allocation3 + $0x10] sm:$0xff]
    %v823 = vld [vmem:[#allocation3 + $0x18] sm:$0xff]
    %v824 = vld [vmem:[#allocation3 + $0x20] sm:$0x3]
    %v825 = vld [vmem:[#allocation3 + $0x28] sm:$0x3]
    %v826 = vld [vmem:[#allocation3 + $0x30] sm:$0xff]
    %v827 = vld [vmem:[#allocation3 + $0x38] sm:$0xff]
    %v828 = vld [vmem:[#allocation3 + $0x40] sm:$0xff]
    %v829 = vld [vmem:[#allocation3 + $0x48] sm:$0xff]
    %v830 = vld [vmem:[#allocation3 + $0x50] sm:$0x3]
    %v831 = vld [vmem:[#allocation3 + $0x58] sm:$0x3]
    %v832 = vld [vmem:[#allocation7] sm:$0xff]
    %v833 = vld [vmem:[#allocation7 + $0x8] sm:$0xff]
    %v834 = vld [vmem:[#allocation7 + $0x10] sm:$0xff]
    %v835 = vld [vmem:[#allocation7 + $0x18] sm:$0xff]
    %v836 = vld [vmem:[#allocation7 + $0x20] sm:$0xff]
    %v837 = vld [vmem:[#allocation7 + $0x28] sm:$0xff]
    %v838 = vld [vmem:[#allocation7 + $0x30] sm:$0xff]
    %v839 = vld [vmem:[#allocation7 + $0x38] sm:$0xff]
    %v840 = vld [vmem:[#allocation7 + $0x40] sm:$0xff]
    %v841 = vld [vmem:[#allocation7 + $0x48] sm:$0xff]
    %v842 = vld [vmem:[#allocation7 + $0x50] sm:$0xff]
    %v843 = vld [vmem:[#allocation7 + $0x58] sm:$0xff]
    %v844 = vld [vmem:[#allocation7 + $0x60] sm:$0xff]
    %v845 = vld [vmem:[#allocation7 + $0x68] sm:$0xff]
    %v846 = vld [vmem:[#allocation7 + $0x70] sm:$0xff]
    %v847 = vld [vmem:[#allocation7 + $0x78] sm:$0xff]
    %v848 = vld [vmem:[#allocation7 + $0x80] sm:$0xff]
    %v849 = vld [vmem:[#allocation7 + $0x88] sm:$0xff]
    %v862 = vrot.slane %v820, 1
    %v863 = vrot.slane %v822, 1
    %v864 = vsel %vm118, %v862, %v863
    %v865 = vrot.slane %v821, 1
    %v866 = vrot.slane %v823, 1
    %v867 = vsel %vm118, %v865, %v866
    %v868 = vrot.slane %v824, 1
    %v869 = vsel %vm118, %v863, %v868
    %v870 = vrot.slane %v825, 1
    %v871 = vsel %vm118, %v866, %v870
    %v872 = vrot.slane %v826, 1
    %v873 = vrot.slane %v828, 1
    %v874 = vsel %vm118, %v872, %v873
    %v875 = vrot.slane %v827, 1
    %v876 = vrot.slane %v829, 1
    %v877 = vsel %vm118, %v875, %v876
    %v878 = vrot.slane %v830, 1
    %v879 = vsel %vm118, %v873, %v878
    %v880 = vrot.slane %v831, 1
    %v881 = vsel %vm118, %v876, %v880
    %s886 = scalar_lea.vmem [#allocation7], 144
    %v887 = vld [vmem:[%s886] sm:$0xff]
    %v888 = vld [vmem:[%s886 + $0x8] sm:$0xff]
    %v889 = vld [vmem:[%s886 + $0x10] sm:$0xff]
    %v890 = vld [vmem:[%s886 + $0x18] sm:$0xff]
    %v891 = vld [vmem:[%s886 + $0x20] sm:$0xff]
    %v892 = vld [vmem:[%s886 + $0x28] sm:$0xff]
    %v893 = vld [vmem:[%s886 + $0x30] sm:$0xff]
    %v894 = vld [vmem:[%s886 + $0x38] sm:$0xff]
    %v895 = vld [vmem:[%s886 + $0x40] sm:$0xff]
    %v896 = vld [vmem:[%s886 + $0x48] sm:$0xff]
    %v897 = vld [vmem:[%s886 + $0x50] sm:$0xff]
    %v898 = vld [vmem:[%s886 + $0x58] sm:$0xff]
    %v899 = vld [vmem:[%s886 + $0x60] sm:$0xff]
    %v900 = vld [vmem:[%s886 + $0x68] sm:$0xff]
    %v901 = vld [vmem:[%s886 + $0x70] sm:$0xff]
    %v902 = vld [vmem:[%s886 + $0x78] sm:$0xff]
    %v903 = vld [vmem:[%s886 + $0x80] sm:$0xff]
    %v904 = vld [vmem:[%s886 + $0x88] sm:$0xff]
    %v905 = vsel %vm782, %v867, 0
    %v907 = vsel %vm782, %v871, 0
    %v909 = vsel %vm782, %v877, 0
    %v911 = vsel %vm782, %v881, 0
    %913 = vmatprep.subr.mxu0 0.0
    %914 = vmatpush1.msra.mxu0 %v887
    %915 = vmatprep.subr.mxu0 0.0
    %916 = vmatpush1.msra.mxu0 %v888
    %917 = vmatprep.subr.mxu0 0.0
    %918 = vmatpush1.msra.mxu0 %v889
    %919 = vmatprep.subr.mxu0 0.0
    %920 = vmatpush1.msra.mxu0 %v890
    %921 = vmatprep.subr.mxu0 0.0
    %922 = vmatpush1.msra.mxu0 %v891
    %923 = vmatprep.subr.mxu0 0.0
    %924 = vmatpush1.msra.mxu0 %v892
    %925 = vmatprep.subr.mxu0 0.0
    %926 = vmatpush1.msra.mxu0 %v893
    %927 = vmatprep.subr.mxu0 0.0
    %928 = vmatpush1.msra.mxu0 %v894
    %929 = vmatprep.subr.mxu0 0.0
    %930 = vmatpush1.msra.mxu0 %v895
    %931 = vmatprep.subr.mxu0 0.0
    %932 = vmatpush1.msra.mxu0 %v896
    %933 = vmatprep.subr.mxu0 0.0
    %934 = vmatpush1.msra.mxu0 %v897
    %935 = vmatprep.subr.mxu0 0.0
    %936 = vmatpush1.msra.mxu0 %v898
    %937 = vmatprep.subr.mxu0 0.0
    %938 = vmatpush1.msra.mxu0 %v899
    %939 = vmatprep.subr.mxu0 0.0
    %940 = vmatpush1.msra.mxu0 %v900
    %941 = vmatprep.subr.mxu0 0.0
    %942 = vmatpush1.msra.mxu0 %v901
    %943 = vmatprep.subr.mxu0 0.0
    %944 = vmatpush1.msra.mxu0 %v902
    %945 = vmatprep.subr.mxu0 0.0
    %946 = vmatpush1.msra.mxu0 %v903
    %947 = vmatprep.subr.mxu0 0.0
    %948 = vmatpush1.msra.mxu0 %v904
    %949 = vmatprep.subr.mxu0 0.0
    %950 = vmatpush1.msra.mxu0 0.0
    %951 = vmatprep.subr.mxu0 0.0
    %952 = vmatpush1.msra.mxu0 0.0
    %953 = vmatprep.subr.mxu0 0.0
    %954 = vmatpush1.msra.mxu0 0.0
    %955 = vmatprep.subr.mxu0 0.0
    %956 = vmatpush1.msra.mxu0 0.0
    %957 = vmatprep.subr.mxu0 0.0
    %958 = vmatpush1.msra.mxu0 0.0
    %959 = vmatprep.subr.mxu0 0.0
    %960 = vmatpush1.msra.mxu0 0.0
    %961 = vmatprep.subr.mxu0 0.0
    %962 = vmatpush1.msra.mxu0 0.0
    %963 = vmatprep.subr.mxu0 0.0
    %964 = vmatpush1.msra.mxu0 0.0
    %965 = vmatprep.subr.mxu0 0.0
    %966 = vmatpush1.msra.mxu0 0.0
    %967 = vmatprep.subr.mxu0 0.0
    %968 = vmatpush1.msra.mxu0 0.0
    %969 = vmatprep.subr.mxu0 0.0
    %970 = vmatpush1.msra.mxu0 0.0
    %971 = vmatprep.subr.mxu0 0.0
    %972 = vmatpush1.msra.mxu0 0.0
    %973 = vmatprep.subr.mxu0 0.0
    %974 = vmatpush1.msra.mxu0 0.0
    %975 = vmatprep.subr.mxu0 0.0
    %976 = vmatpush1.msra.mxu0 0.0
    %977 = vmatprep.mubr.f32.mxu0 %v905
    %978 = vmatmul.mubr.f32.gmra.mrb[0].mxu0 %v864
    %v979 = vpop.f32.mrb[0].mxu0
    %v980 = vadd.f32 0.0, %v979
    %v981 = vpop.f32.mrb[0].mxu0
    %982 = vmatprep.mubr.f32.mxu0 %v907
    %983 = vmatmul.mubr.f32.gmra.mrb[0].mxu0 %v869
    %v984 = vpop.f32.mrb[0].mxu0
    %v985 = vadd.f32 0.0, %v984
    %v986 = vpop.f32.mrb[0].mxu0
    %987 = vmatprep.mubr.f32.mxu0 %v909
    %988 = vmatmul.mubr.f32.gmra.mrb[0].mxu0 %v874
    %v989 = vpop.f32.mrb[0].mxu0
    %v990 = vadd.f32 0.0, %v989
    %v991 = vpop.f32.mrb[0].mxu0
    %992 = vmatprep.mubr.f32.mxu0 %v911
    %993 = vmatmul.mubr.f32.gmra.mrb[0].mxu0 %v879
    %v994 = vpop.f32.mrb[0].mxu0
    %v995 = vadd.f32 0.0, %v994
    %v996 = vpop.f32.mrb[0].mxu0
    %997 = vdwg.mxu0
    %v998 = vsel %vm782, %v821, 0
    %v1000 = vsel %vm782, %v823, 0
    %v1002 = vsel %vm782, %v827, 0
    %v1004 = vsel %vm782, %v829, 0
    %1006 = vmatprep.subr.mxu0 0.0
    %1007 = vmatpush1.msra.mxu0 %v832
    %1008 = vmatprep.subr.mxu0 0.0
    %1009 = vmatpush1.msra.mxu0 %v833
    %1010 = vmatprep.subr.mxu0 0.0
    %1011 = vmatpush1.msra.mxu0 %v834
    %1012 = vmatprep.subr.mxu0 0.0
    %1013 = vmatpush1.msra.mxu0 %v835
    %1014 = vmatprep.subr.mxu0 0.0
    %1015 = vmatpush1.msra.mxu0 %v836
    %1016 = vmatprep.subr.mxu0 0.0
    %1017 = vmatpush1.msra.mxu0 %v837
    %1018 = vmatprep.subr.mxu0 0.0
    %1019 = vmatpush1.msra.mxu0 %v838
    %1020 = vmatprep.subr.mxu0 0.0
    %1021 = vmatpush1.msra.mxu0 %v839
    %1022 = vmatprep.subr.mxu0 0.0
    %1023 = vmatpush1.msra.mxu0 %v840
    %1024 = vmatprep.subr.mxu0 0.0
    %1025 = vmatpush1.msra.mxu0 %v841
    %1026 = vmatprep.subr.mxu0 0.0
    %1027 = vmatpush1.msra.mxu0 %v842
    %1028 = vmatprep.subr.mxu0 0.0
    %1029 = vmatpush1.msra.mxu0 %v843
    %1030 = vmatprep.subr.mxu0 0.0
    %1031 = vmatpush1.msra.mxu0 %v844
    %1032 = vmatprep.subr.mxu0 0.0
    %1033 = vmatpush1.msra.mxu0 %v845
    %1034 = vmatprep.subr.mxu0 0.0
    %1035 = vmatpush1.msra.mxu0 %v846
    %1036 = vmatprep.subr.mxu0 0.0
    %1037 = vmatpush1.msra.mxu0 %v847
    %1038 = vmatprep.subr.mxu0 0.0
    %1039 = vmatpush1.msra.mxu0 %v848
    %1040 = vmatprep.subr.mxu0 0.0
    %1041 = vmatpush1.msra.mxu0 %v849
    %1042 = vmatprep.subr.mxu0 0.0
    %1043 = vmatpush1.msra.mxu0 0.0
    %1044 = vmatprep.subr.mxu0 0.0
    %1045 = vmatpush1.msra.mxu0 0.0
    %1046 = vmatprep.subr.mxu0 0.0
    %1047 = vmatpush1.msra.mxu0 0.0
    %1048 = vmatprep.subr.mxu0 0.0
    %1049 = vmatpush1.msra.mxu0 0.0
    %1050 = vmatprep.subr.mxu0 0.0
    %1051 = vmatpush1.msra.mxu0 0.0
    %1052 = vmatprep.subr.mxu0 0.0
    %1053 = vmatpush1.msra.mxu0 0.0
    %1054 = vmatprep.subr.mxu0 0.0
    %1055 = vmatpush1.msra.mxu0 0.0
    %1056 = vmatprep.subr.mxu0 0.0
    %1057 = vmatpush1.msra.mxu0 0.0
    %1058 = vmatprep.subr.mxu0 0.0
    %1059 = vmatpush1.msra.mxu0 0.0
    %1060 = vmatprep.subr.mxu0 0.0
    %1061 = vmatpush1.msra.mxu0 0.0
    %1062 = vmatprep.subr.mxu0 0.0
    %1063 = vmatpush1.msra.mxu0 0.0
    %1064 = vmatprep.subr.mxu0 0.0
    %1065 = vmatpush1.msra.mxu0 0.0
    %1066 = vmatprep.subr.mxu0 0.0
    %1067 = vmatpush1.msra.mxu0 0.0
    %1068 = vmatprep.subr.mxu0 0.0
    %1069 = vmatpush1.msra.mxu0 0.0
    %1070 = vmatprep.mubr.f32.mxu0 %v998
    %1071 = vmatmul.mubr.f32.gmra.mrb[0].mxu0 %v820
    %v1072 = vpop.f32.mrb[0].mxu0
    %v1073 = vadd.f32 %v980, %v1072
    %v1074 = vpop.f32.mrb[0].mxu0
    %1075 = vmatprep.mubr.f32.mxu0 %v1000
    %1076 = vmatmul.mubr.f32.gmra.mrb[0].mxu0 %v822
    %v1077 = vpop.f32.mrb[0].mxu0
    %v1078 = vadd.f32 %v985, %v1077
    %v1079 = vpop.f32.mrb[0].mxu0
    %1080 = vmatprep.mubr.f32.mxu0 %v1002
    %1081 = vmatmul.mubr.f32.gmra.mrb[0].mxu0 %v826
    %v1082 = vpop.f32.mrb[0].mxu0
    %v1083 = vadd.f32 %v990, %v1082
    %v1084 = vpop.f32.mrb[0].mxu0
    %1085 = vmatprep.mubr.f32.mxu0 %v1004
    %1086 = vmatmul.mubr.f32.gmra.mrb[0].mxu0 %v828
    %v1087 = vpop.f32.mrb[0].mxu0
    %v1088 = vadd.f32 %v995, %v1087
    %v1089 = vpop.f32.mrb[0].mxu0
    %1090 = vdwg.mxu0
    %v1091 = vrot.slane %v820, 2
    %v1092 = vrot.slane %v822, 2
    %v1093 = vsel %vm325, %v1091, %v1092
    %v1094 = vrot.slane %v821, 2
    %v1095 = vrot.slane %v823, 2
    %v1096 = vsel %vm325, %v1094, %v1095
    %v1097 = vrot.slane %v824, 2
    %v1098 = vsel %vm325, %v1092, %v1097
    %v1099 = vrot.slane %v825, 2
    %v1100 = vsel %vm325, %v1095, %v1099
    %v1101 = vrot.slane %v826, 2
    %v1102 = vrot.slane %v828, 2
    %v1103 = vsel %vm325, %v1101, %v1102
    %v1104 = vrot.slane %v827, 2
    %v1105 = vrot.slane %v829, 2
    %v1106 = vsel %vm325, %v1104, %v1105
    %v1107 = vrot.slane %v830, 2
    %v1108 = vsel %vm325, %v1102, %v1107
    %v1109 = vrot.slane %v831, 2
    %v1110 = vsel %vm325, %v1105, %v1109
    %s1115 = scalar_lea.vmem [#allocation7], 288
    %v1116 = vld [vmem:[%s1115] sm:$0xff]
    %v1117 = vld [vmem:[%s1115 + $0x8] sm:$0xff]
    %v1118 = vld [vmem:[%s1115 + $0x10] sm:$0xff]
    %v1119 = vld [vmem:[%s1115 + $0x18] sm:$0xff]
    %v1120 = vld [vmem:[%s1115 + $0x20] sm:$0xff]
    %v1121 = vld [vmem:[%s1115 + $0x28] sm:$0xff]
    %v1122 = vld [vmem:[%s1115 + $0x30] sm:$0xff]
    %v1123 = vld [vmem:[%s1115 + $0x38] sm:$0xff]
    %v1124 = vld [vmem:[%s1115 + $0x40] sm:$0xff]
    %v1125 = vld [vmem:[%s1115 + $0x48] sm:$0xff]
    %v1126 = vld [vmem:[%s1115 + $0x50] sm:$0xff]
    %v1127 = vld [vmem:[%s1115 + $0x58] sm:$0xff]
    %v1128 = vld [vmem:[%s1115 + $0x60] sm:$0xff]
    %v1129 = vld [vmem:[%s1115 + $0x68] sm:$0xff]
    %v1130 = vld [vmem:[%s1115 + $0x70] sm:$0xff]
    %v1131 = vld [vmem:[%s1115 + $0x78] sm:$0xff]
    %v1132 = vld [vmem:[%s1115 + $0x80] sm:$0xff]
    %v1133 = vld [vmem:[%s1115 + $0x88] sm:$0xff]
    %v1134 = vsel %vm782, %v1096, 0
    %v1136 = vsel %vm782, %v1100, 0
    %v1138 = vsel %vm782, %v1106, 0
    %v1140 = vsel %vm782, %v1110, 0
    %1142 = vmatprep.subr.mxu0 0.0
    %1143 = vmatpush1.msra.mxu0 %v1116
    %1144 = vmatprep.subr.mxu0 0.0
    %1145 = vmatpush1.msra.mxu0 %v1117
    %1146 = vmatprep.subr.mxu0 0.0
    %1147 = vmatpush1.msra.mxu0 %v1118
    %1148 = vmatprep.subr.mxu0 0.0
    %1149 = vmatpush1.msra.mxu0 %v1119
    %1150 = vmatprep.subr.mxu0 0.0
    %1151 = vmatpush1.msra.mxu0 %v1120
    %1152 = vmatprep.subr.mxu0 0.0
    %1153 = vmatpush1.msra.mxu0 %v1121
    %1154 = vmatprep.subr.mxu0 0.0
    %1155 = vmatpush1.msra.mxu0 %v1122
    %1156 = vmatprep.subr.mxu0 0.0
    %1157 = vmatpush1.msra.mxu0 %v1123
    %1158 = vmatprep.subr.mxu0 0.0
    %1159 = vmatpush1.msra.mxu0 %v1124
    %1160 = vmatprep.subr.mxu0 0.0
    %1161 = vmatpush1.msra.mxu0 %v1125
    %1162 = vmatprep.subr.mxu0 0.0
    %1163 = vmatpush1.msra.mxu0 %v1126
    %1164 = vmatprep.subr.mxu0 0.0
    %1165 = vmatpush1.msra.mxu0 %v1127
    %1166 = vmatprep.subr.mxu0 0.0
    %1167 = vmatpush1.msra.mxu0 %v1128
    %1168 = vmatprep.subr.mxu0 0.0
    %1169 = vmatpush1.msra.mxu0 %v1129
    %1170 = vmatprep.subr.mxu0 0.0
    %1171 = vmatpush1.msra.mxu0 %v1130
    %1172 = vmatprep.subr.mxu0 0.0
    %1173 = vmatpush1.msra.mxu0 %v1131
    %1174 = vmatprep.subr.mxu0 0.0
    %1175 = vmatpush1.msra.mxu0 %v1132
    %1176 = vmatprep.subr.mxu0 0.0
    %1177 = vmatpush1.msra.mxu0 %v1133
    %1178 = vmatprep.subr.mxu0 0.0
    %1179 = vmatpush1.msra.mxu0 0.0
    %1180 = vmatprep.subr.mxu0 0.0
    %1181 = vmatpush1.msra.mxu0 0.0
    %1182 = vmatprep.subr.mxu0 0.0
    %1183 = vmatpush1.msra.mxu0 0.0
    %1184 = vmatprep.subr.mxu0 0.0
    %1185 = vmatpush1.msra.mxu0 0.0
    %1186 = vmatprep.subr.mxu0 0.0
    %1187 = vmatpush1.msra.mxu0 0.0
    %1188 = vmatprep.subr.mxu0 0.0
    %1189 = vmatpush1.msra.mxu0 0.0
    %1190 = vmatprep.subr.mxu0 0.0
    %1191 = vmatpush1.msra.mxu0 0.0
    %1192 = vmatprep.subr.mxu0 0.0
    %1193 = vmatpush1.msra.mxu0 0.0
    %1194 = vmatprep.subr.mxu0 0.0
    %1195 = vmatpush1.msra.mxu0 0.0
    %1196 = vmatprep.subr.mxu0 0.0
    %1197 = vmatpush1.msra.mxu0 0.0
    %1198 = vmatprep.subr.mxu0 0.0
    %1199 = vmatpush1.msra.mxu0 0.0
    %1200 = vmatprep.subr.mxu0 0.0
    %1201 = vmatpush1.msra.mxu0 0.0
    %1202 = vmatprep.subr.mxu0 0.0
    %1203 = vmatpush1.msra.mxu0 0.0
    %1204 = vmatprep.subr.mxu0 0.0
    %1205 = vmatpush1.msra.mxu0 0.0
    %1206 = vmatprep.mubr.f32.mxu0 %v1134
    %1207 = vmatmul.mubr.f32.gmra.mrb[0].mxu0 %v1093
    %v1208 = vpop.f32.mrb[0].mxu0
    %v1209 = vadd.f32 0.0, %v1208
    %v1210 = vpop.f32.mrb[0].mxu0
    %1211 = vmatprep.mubr.f32.mxu0 %v1136
    %1212 = vmatmul.mubr.f32.gmra.mrb[0].mxu0 %v1098
    %v1213 = vpop.f32.mrb[0].mxu0
    %v1214 = vadd.f32 0.0, %v1213
    %v1215 = vpop.f32.mrb[0].mxu0
    %1216 = vmatprep.mubr.f32.mxu0 %v1138
    %1217 = vmatmul.mubr.f32.gmra.mrb[0].mxu0 %v1103
    %v1218 = vpop.f32.mrb[0].mxu0
    %v1219 = vadd.f32 0.0, %v1218
    %v1220 = vpop.f32.mrb[0].mxu0
    %1221 = vmatprep.mubr.f32.mxu0 %v1140
    %1222 = vmatmul.mubr.f32.gmra.mrb[0].mxu0 %v1108
    %v1223 = vpop.f32.mrb[0].mxu0
    %v1224 = vadd.f32 0.0, %v1223
    %v1225 = vpop.f32.mrb[0].mxu0
    %1226 = vdwg.mxu0
    %v1227 = vadd.f32 %v1073, %v1209
    %v1228 = vadd.f32 %v1078, %v1214
    %v1229 = vadd.f32 %v1083, %v1219
    %v1230 = vadd.f32 %v1088, %v1224
    %v1231 = vadd.f32 %v1227, %v1228
    %v1232 = vadd.f32 %v1231, %v1229
    %v1233 = vadd.f32 %v1232, %v1230
    %v1234 = vrot.slane %v1233, 4
    %v1235 = vadd.f32 %v1233, %v1234
    %v1236 = vrot.slane %v1235, 2
    %v1237 = vadd.f32 %v1235, %v1236
    %v1238 = vrot.slane %v1237, 1
    %v1239 = vadd.f32 %v1237, %v1238
    %v1240 = vmul.f32 %v1227, %v1227
    %v1241 = vmul.f32 %v1228, %v1228
    %v1242 = vmul.f32 %v1229, %v1229
    %v1243 = vmul.f32 %v1230, %v1230
    %v1244 = vadd.f32 %v1240, %v1241
    %v1245 = vadd.f32 %v1244, %v1242
    %v1246 = vadd.f32 %v1245, %v1243
    %v1247 = vrot.slane %v1246, 4
    %v1248 = vadd.f32 %v1246, %v1247
    %v1249 = vrot.slane %v1248, 2
    %v1250 = vadd.f32 %v1248, %v1249
    %v1251 = vrot.slane %v1250, 1
    %v1252 = vadd.f32 %v1250, %v1251
    %1253 = vmatprep.subr.mxu0 0.0
    %1254 = vmatpush1.msra.mxu0 %v61
    %1255 = vmatprep.subr.mxu0 0.0
    %1256 = vmatpush1.msra.mxu0 %v62
    %1257 = vmatprep.subr.mxu0 0.0
    %1258 = vmatpush1.msra.mxu0 %v63
    %1259 = vmatprep.subr.mxu0 0.0
    %1260 = vmatpush1.msra.mxu0 %v64
    %1261 = vmatprep.subr.mxu0 0.0
    %1262 = vmatpush1.msra.mxu0 %v65
    %1263 = vmatprep.subr.mxu0 0.0
    %1264 = vmatpush1.msra.mxu0 %v66
    %1265 = vmatprep.subr.mxu0 0.0
    %1266 = vmatpush1.msra.mxu0 %v67
    %1267 = vmatprep.subr.mxu0 0.0
    %1268 = vmatpush1.msra.mxu0 %v68
    %1269 = vmatprep.subr.mxu0 0.0
    %1270 = vmatpush1.msra.mxu0 %v69
    %1271 = vmatprep.subr.mxu0 0.0
    %1272 = vmatpush1.msra.mxu0 %v70
    %1273 = vmatprep.subr.mxu0 0.0
    %1274 = vmatpush1.msra.mxu0 %v71
    %1275 = vmatprep.subr.mxu0 0.0
    %1276 = vmatpush1.msra.mxu0 %v72
    %1277 = vmatprep.subr.mxu0 0.0
    %1278 = vmatpush1.msra.mxu0 %v73
    %1279 = vmatprep.subr.mxu0 0.0
    %1280 = vmatpush1.msra.mxu0 %v74
    %1281 = vmatprep.subr.mxu0 0.0
    %1282 = vmatpush1.msra.mxu0 %v75
    %1283 = vmatprep.subr.mxu0 0.0
    %1284 = vmatpush1.msra.mxu0 %v76
    %1285 = vmatprep.subr.mxu0 0.0
    %1286 = vmatpush1.msra.mxu0 0.0
    %1287 = vmatprep.subr.mxu0 0.0
    %1288 = vmatpush1.msra.mxu0 0.0
    %1289 = vmatprep.subr.mxu0 0.0
    %1290 = vmatpush1.msra.mxu0 0.0
    %1291 = vmatprep.subr.mxu0 0.0
    %1292 = vmatpush1.msra.mxu0 0.0
    %1293 = vmatprep.subr.mxu0 0.0
    %1294 = vmatpush1.msra.mxu0 0.0
    %1295 = vmatprep.subr.mxu0 0.0
    %1296 = vmatpush1.msra.mxu0 0.0
    %1297 = vmatprep.subr.mxu0 0.0
    %1298 = vmatpush1.msra.mxu0 0.0
    %1299 = vmatprep.subr.mxu0 0.0
    %1300 = vmatpush1.msra.mxu0 0.0
    %1301 = vmatprep.subr.mxu0 0.0
    %1302 = vmatpush1.msra.mxu0 0.0
    %1303 = vmatprep.subr.mxu0 0.0
    %1304 = vmatpush1.msra.mxu0 0.0
    %1305 = vmatprep.subr.mxu0 0.0
    %1306 = vmatpush1.msra.mxu0 0.0
    %1307 = vmatprep.subr.mxu0 0.0
    %1308 = vmatpush1.msra.mxu0 0.0
    %1309 = vmatprep.subr.mxu0 0.0
    %1310 = vmatpush1.msra.mxu0 0.0
    %1311 = vmatprep.subr.mxu0 0.0
    %1312 = vmatpush1.msra.mxu0 0.0
    %1313 = vmatprep.subr.mxu0 0.0
    %1314 = vmatpush1.msra.mxu0 0.0
    %1315 = vmatprep.subr.mxu0 0.0
    %1316 = vmatpush1.msra.mxu0 0.0
    %1317 = vmatprep.mubr.f32.mxu0 0.0
    %1318 = vmatmul.mubr.f32.gmra.mrb[0].mxu0 %v1239
    %v1319 = vpop.f32.mrb[0].mxu0
    %v1320 = vadd.f32 0.0, %v1319
    %v1321 = vpop.f32.mrb[0].mxu0
    %1322 = vdwg.mxu0
    %1323 = vmatprep.subr.mxu0 0.0
    %1324 = vmatpush1.msra.mxu0 %v61
    %1325 = vmatprep.subr.mxu0 0.0
    %1326 = vmatpush1.msra.mxu0 %v62
    %1327 = vmatprep.subr.mxu0 0.0
    %1328 = vmatpush1.msra.mxu0 %v63
    %1329 = vmatprep.subr.mxu0 0.0
    %1330 = vmatpush1.msra.mxu0 %v64
    %1331 = vmatprep.subr.mxu0 0.0
    %1332 = vmatpush1.msra.mxu0 %v65
    %1333 = vmatprep.subr.mxu0 0.0
    %1334 = vmatpush1.msra.mxu0 %v66
    %1335 = vmatprep.subr.mxu0 0.0
    %1336 = vmatpush1.msra.mxu0 %v67
    %1337 = vmatprep.subr.mxu0 0.0
    %1338 = vmatpush1.msra.mxu0 %v68
    %1339 = vmatprep.subr.mxu0 0.0
    %1340 = vmatpush1.msra.mxu0 %v69
    %1341 = vmatprep.subr.mxu0 0.0
    %1342 = vmatpush1.msra.mxu0 %v70
    %1343 = vmatprep.subr.mxu0 0.0
    %1344 = vmatpush1.msra.mxu0 %v71
    %1345 = vmatprep.subr.mxu0 0.0
    %1346 = vmatpush1.msra.mxu0 %v72
    %1347 = vmatprep.subr.mxu0 0.0
    %1348 = vmatpush1.msra.mxu0 %v73
    %1349 = vmatprep.subr.mxu0 0.0
    %1350 = vmatpush1.msra.mxu0 %v74
    %1351 = vmatprep.subr.mxu0 0.0
    %1352 = vmatpush1.msra.mxu0 %v75
    %1353 = vmatprep.subr.mxu0 0.0
    %1354 = vmatpush1.msra.mxu0 %v76
    %1355 = vmatprep.subr.mxu0 0.0
    %1356 = vmatpush1.msra.mxu0 0.0
    %1357 = vmatprep.subr.mxu0 0.0
    %1358 = vmatpush1.msra.mxu0 0.0
    %1359 = vmatprep.subr.mxu0 0.0
    %1360 = vmatpush1.msra.mxu0 0.0
    %1361 = vmatprep.subr.mxu0 0.0
    %1362 = vmatpush1.msra.mxu0 0.0
    %1363 = vmatprep.subr.mxu0 0.0
    %1364 = vmatpush1.msra.mxu0 0.0
    %1365 = vmatprep.subr.mxu0 0.0
    %1366 = vmatpush1.msra.mxu0 0.0
    %1367 = vmatprep.subr.mxu0 0.0
    %1368 = vmatpush1.msra.mxu0 0.0
    %1369 = vmatprep.subr.mxu0 0.0
    %1370 = vmatpush1.msra.mxu0 0.0
    %1371 = vmatprep.subr.mxu0 0.0
    %1372 = vmatpush1.msra.mxu0 0.0
    %1373 = vmatprep.subr.mxu0 0.0
    %1374 = vmatpush1.msra.mxu0 0.0
    %1375 = vmatprep.subr.mxu0 0.0
    %1376 = vmatpush1.msra.mxu0 0.0
    %1377 = vmatprep.subr.mxu0 0.0
    %1378 = vmatpush1.msra.mxu0 0.0
    %1379 = vmatprep.subr.mxu0 0.0
    %1380 = vmatpush1.msra.mxu0 0.0
    %1381 = vmatprep.subr.mxu0 0.0
    %1382 = vmatpush1.msra.mxu0 0.0
    %1383 = vmatprep.subr.mxu0 0.0
    %1384 = vmatpush1.msra.mxu0 0.0
    %1385 = vmatprep.subr.mxu0 0.0
    %1386 = vmatpush1.msra.mxu0 0.0
    %1387 = vmatprep.mubr.f32.mxu0 0.0
    %1388 = vmatmul.mubr.f32.gmra.mrb[0].mxu0 %v1252
    %v1389 = vpop.f32.mrb[0].mxu0
    %v1390 = vadd.f32 0.0, %v1389
    %v1391 = vpop.f32.mrb[0].mxu0
    %1392 = vdwg.mxu0
    %v1393 = vmul.f32 %v1320, 0.001953125
    %v1394 = vmul.f32 %v1390, 0.001953125
    %v1395 = vmul.f32 %v1393, %v1393
    %v1396 = vsub.f32 %v1394, %v1395
    %v1397 = vadd.f32 %v1396, 1e-05
    %v1398 = vrsqrt.pop %v1397
    %v1399 = vmul.f32 %v818, %v1398
    %v1400 = vmul.f32 %v1393, %v1399
    %v1401 = vsub.f32 %v819, %v1400
    %v1403 = vsel %vm614, %v1399, 0
    %1405 = vmatprep.subr.mxu0 0.0
    %1406 = vmatpush1.msra.mxu0 %v77
    %1407 = vmatprep.subr.mxu0 0.0
    %1408 = vmatpush1.msra.mxu0 0.0
    %1409 = vmatprep.subr.mxu0 0.0
    %1410 = vmatpush1.msra.mxu0 0.0
    %1411 = vmatprep.subr.mxu0 0.0
    %1412 = vmatpush1.msra.mxu0 0.0
    %1413 = vmatprep.subr.mxu0 0.0
    %1414 = vmatpush1.msra.mxu0 0.0
    %1415 = vmatprep.subr.mxu0 0.0
    %1416 = vmatpush1.msra.mxu0 0.0
    %1417 = vmatprep.subr.mxu0 0.0
    %1418 = vmatpush1.msra.mxu0 0.0
    %1419 = vmatprep.subr.mxu0 0.0
    %1420 = vmatpush1.msra.mxu0 0.0
    %1421 = vmatprep.subr.mxu0 0.0
    %1422 = vmatpush1.msra.mxu0 0.0
    %1423 = vmatprep.subr.mxu0 0.0
    %1424 = vmatpush1.msra.mxu0 0.0
    %1425 = vmatprep.subr.mxu0 0.0
    %1426 = vmatpush1.msra.mxu0 0.0
    %1427 = vmatprep.subr.mxu0 0.0
    %1428 = vmatpush1.msra.mxu0 0.0
    %1429 = vmatprep.subr.mxu0 0.0
    %1430 = vmatpush1.msra.mxu0 0.0
    %1431 = vmatprep.subr.mxu0 0.0
    %1432 = vmatpush1.msra.mxu0 0.0
    %1433 = vmatprep.subr.mxu0 0.0
    %1434 = vmatpush1.msra.mxu0 0.0
    %1435 = vmatprep.subr.mxu0 0.0
    %1436 = vmatpush1.msra.mxu0 0.0
    %1437 = vmatprep.subr.mxu0 0.0
    %1438 = vmatpush1.msra.mxu0 0.0
    %1439 = vmatprep.subr.mxu0 0.0
    %1440 = vmatpush1.msra.mxu0 0.0
    %1441 = vmatprep.subr.mxu0 0.0
    %1442 = vmatpush1.msra.mxu0 0.0
    %1443 = vmatprep.subr.mxu0 0.0
    %1444 = vmatpush1.msra.mxu0 0.0
    %1445 = vmatprep.subr.mxu0 0.0
    %1446 = vmatpush1.msra.mxu0 0.0
    %1447 = vmatprep.subr.mxu0 0.0
    %1448 = vmatpush1.msra.mxu0 0.0
    %1449 = vmatprep.subr.mxu0 0.0
    %1450 = vmatpush1.msra.mxu0 0.0
    %1451 = vmatprep.subr.mxu0 0.0
    %1452 = vmatpush1.msra.mxu0 0.0
    %1453 = vmatprep.subr.mxu0 0.0
    %1454 = vmatpush1.msra.mxu0 0.0
    %1455 = vmatprep.subr.mxu0 0.0
    %1456 = vmatpush1.msra.mxu0 0.0
    %1457 = vmatprep.subr.mxu0 0.0
    %1458 = vmatpush1.msra.mxu0 0.0
    %1459 = vmatprep.subr.mxu0 0.0
    %1460 = vmatpush1.msra.mxu0 0.0
    %1461 = vmatprep.subr.mxu0 0.0
    %1462 = vmatpush1.msra.mxu0 0.0
    %1463 = vmatprep.subr.mxu0 0.0
    %1464 = vmatpush1.msra.mxu0 0.0
    %1465 = vmatprep.subr.mxu0 0.0
    %1466 = vmatpush1.msra.mxu0 0.0
    %1467 = vmatprep.subr.mxu0 0.0
    %1468 = vmatpush1.msra.mxu0 0.0
    %1469 = vmatprep.mubr.f32.mxu0 0.0
    %1470 = vmatmul.mubr.f32.gmra.mrb[0].mxu0 %v1403
    %v1471 = vpop.f32.mrb[0].mxu0
    %v1472 = vadd.f32 0.0, %v1471
    %v1473 = vpop.f32.mrb[0].mxu0
    %1474 = vdwg.mxu0
    %v1476 = vsel %vm614, %v1401, 0
    %1478 = vmatprep.subr.mxu0 0.0
    %1479 = vmatpush1.msra.mxu0 %v77
    %1480 = vmatprep.subr.mxu0 0.0
    %1481 = vmatpush1.msra.mxu0 0.0
    %1482 = vmatprep.subr.mxu0 0.0
    %1483 = vmatpush1.msra.mxu0 0.0
    %1484 = vmatprep.subr.mxu0 0.0
    %1485 = vmatpush1.msra.mxu0 0.0
    %1486 = vmatprep.subr.mxu0 0.0
    %1487 = vmatpush1.msra.mxu0 0.0
    %1488 = vmatprep.subr.mxu0 0.0
    %1489 = vmatpush1.msra.mxu0 0.0
    %1490 = vmatprep.subr.mxu0 0.0
    %1491 = vmatpush1.msra.mxu0 0.0
    %1492 = vmatprep.subr.mxu0 0.0
    %1493 = vmatpush1.msra.mxu0 0.0
    %1494 = vmatprep.subr.mxu0 0.0
    %1495 = vmatpush1.msra.mxu0 0.0
    %1496 = vmatprep.subr.mxu0 0.0
    %1497 = vmatpush1.msra.mxu0 0.0
    %1498 = vmatprep.subr.mxu0 0.0
    %1499 = vmatpush1.msra.mxu0 0.0
    %1500 = vmatprep.subr.mxu0 0.0
    %1501 = vmatpush1.msra.mxu0 0.0
    %1502 = vmatprep.subr.mxu0 0.0
    %1503 = vmatpush1.msra.mxu0 0.0
    %1504 = vmatprep.subr.mxu0 0.0
    %1505 = vmatpush1.msra.mxu0 0.0
    %1506 = vmatprep.subr.mxu0 0.0
    %1507 = vmatpush1.msra.mxu0 0.0
    %1508 = vmatprep.subr.mxu0 0.0
    %1509 = vmatpush1.msra.mxu0 0.0
    %1510 = vmatprep.subr.mxu0 0.0
    %1511 = vmatpush1.msra.mxu0 0.0
    %1512 = vmatprep.subr.mxu0 0.0
    %1513 = vmatpush1.msra.mxu0 0.0
    %1514 = vmatprep.subr.mxu0 0.0
    %1515 = vmatpush1.msra.mxu0 0.0
    %1516 = vmatprep.subr.mxu0 0.0
    %1517 = vmatpush1.msra.mxu0 0.0
    %1518 = vmatprep.subr.mxu0 0.0
    %1519 = vmatpush1.msra.mxu0 0.0
    %1520 = vmatprep.subr.mxu0 0.0
    %1521 = vmatpush1.msra.mxu0 0.0
    %1522 = vmatprep.subr.mxu0 0.0
    %1523 = vmatpush1.msra.mxu0 0.0
    %1524 = vmatprep.subr.mxu0 0.0
    %1525 = vmatpush1.msra.mxu0 0.0
    %1526 = vmatprep.subr.mxu0 0.0
    %1527 = vmatpush1.msra.mxu0 0.0
    %1528 = vmatprep.subr.mxu0 0.0
    %1529 = vmatpush1.msra.mxu0 0.0
    %1530 = vmatprep.subr.mxu0 0.0
    %1531 = vmatpush1.msra.mxu0 0.0
    %1532 = vmatprep.subr.mxu0 0.0
    %1533 = vmatpush1.msra.mxu0 0.0
    %1534 = vmatprep.subr.mxu0 0.0
    %1535 = vmatpush1.msra.mxu0 0.0
    %1536 = vmatprep.subr.mxu0 0.0
    %1537 = vmatpush1.msra.mxu0 0.0
    %1538 = vmatprep.subr.mxu0 0.0
    %1539 = vmatpush1.msra.mxu0 0.0
    %1540 = vmatprep.subr.mxu0 0.0
    %1541 = vmatpush1.msra.mxu0 0.0
    %1542 = vmatprep.mubr.f32.mxu0 0.0
    %1543 = vmatmul.mubr.f32.gmra.mrb[0].mxu0 %v1476
    %v1544 = vpop.f32.mrb[0].mxu0
    %v1545 = vadd.f32 0.0, %v1544
    %v1546 = vpop.f32.mrb[0].mxu0
    %1547 = vdwg.mxu0
    %v1548 = vlaneseq
    %v1549 = vshrl.u32 %v1548, 7
    %v1550 = vsub.s32 0, %v1549
    %v1551 = vrot.slane %v1472, %v1550
    %v1552 = vmul.f32 %v1227, %v1551
    %v1553 = vmul.f32 %v1228, %v1551
    %v1554 = vmul.f32 %v1229, %v1551
    %v1555 = vmul.f32 %v1230, %v1551
    %v1556 = vlaneseq
    %v1557 = vshrl.u32 %v1556, 7
    %v1558 = vsub.s32 0, %v1557
    %v1559 = vrot.slane %v1545, %v1558
    %v1560 = vadd.f32 %v1552, %v1559
    %v1561 = vadd.f32 %v1553, %v1559
    %v1562 = vadd.f32 %v1554, %v1559
    %v1563 = vadd.f32 %v1555, %v1559
    %v1564 = vmax.f32 %v1560, 0.0
    %v1565 = vmax.f32 %v1561, 0.0
    %v1566 = vmax.f32 %v1562, 0.0
    %v1567 = vmax.f32 %v1563, 0.0
    %1568 = vst [vmem:[#allocation9] sm:$0xff] %v1564
    %1569 = vst [vmem:[#allocation9 + $0x8] sm:$0xff] %v1565
    %1570 = vst [vmem:[#allocation9 + $0x10] sm:$0xff] %v1566
    %1571 = vst [vmem:[#allocation9 + $0x18] sm:$0xff] %v1567
    // Predicated region
    $region46: #{tpu_custom_call.1} parent=1 // pred_check
      _
    $region47: #{tpu_custom_call.1} parent=1 // pred_check_branch
      %1573 = sbr.rel (0) target = $region49
    $region48: #{tpu_custom_call.1} parent=1 // pred_region
      %s1575 = ssub.s32 512, 512
      %1576 = vsyncadd [#allocation6], %s1575
      %s1577 = sshll.u32 [#allocation9], 4
      %s1578 = int_to_ptr.vmem [resolvable:$true] %s1577
      %1583 = dma.vmem_to_hbm [thread:$0]  %s1578, 512, %s9, [#allocation6], 128, 128, 8
    $region49: #{tpu_custom_call.1} parent=1 // pred_fallthru
      _
    // Predicated region
    $region50: #{tpu_custom_call.1} parent=1 // pred_check
      _
    $region51: #{tpu_custom_call.1} parent=1 // pred_check_branch
      %1585 = sbr.rel (0) target = $region53
    $region52: #{tpu_custom_call.1} parent=1 // pred_region
      %1586 = dma.done [#allocation6], 512
    $region53: #{tpu_custom_call.1} parent=1 // pred_fallthru
      _
    %1587 = vsyncpa [#allocation5], 1
    %1588 = vsyncpa [#allocation8], 1
    %1589 = vsyncpa [#allocation6], 1

</llo_original>
